<compile_context>
chip_gen: v7x
topology: tpu7x:2x2x1
jax: 0.10.0
libtpu: 0.0.40
codegen_flags: <defaults>
</compile_context>

<pallas_src>
import functools

import jax
import jax.numpy as jnp
from jax.experimental import pallas as pl
from jax.experimental.pallas import tpu as pltpu


# ---------------------------------------------------------------------------
# helpers
# ---------------------------------------------------------------------------
def _round_up(v, m):
    return (v + m - 1) // m * m


def _largest_divisor(value, limit, align):
    """Largest multiple of `align` that is <= `limit` and divides `value`."""
    best = None
    cand = align
    while cand <= limit:
        if value % cand == 0:
            best = cand
        cand += align
    if best is None:
        raise ValueError(f"no multiple of {align} <= {limit} divides {value}")
    return best


def _vmem_limit_bytes():
    # Per-generation scoped-VMEM budget (v5e/v6e: 128 MiB physical, v7x: 64 MiB).
    try:
        cap = int(pltpu.get_tpu_info().vmem_capacity_bytes)
        if cap <= 0:
            raise ValueError("bad vmem capacity")
    except Exception:
        cap = 64 * 1024 * 1024
    return max(16 * 1024 * 1024, min(cap // 2, 64 * 1024 * 1024))


_VMEM_LIMIT = _vmem_limit_bytes()
_MATMUL_CPARAMS = pltpu.CompilerParams(
    dimension_semantics=("parallel", "parallel", "arbitrary"),
    vmem_limit_bytes=_VMEM_LIMIT,
)


# ---------------------------------------------------------------------------
# Pallas kernels
# ---------------------------------------------------------------------------
def _matmul_kernel(x_ref, w_ref, s_ref, b_ref, o_ref, acc_ref, *, relu):
    """o = act((x @ w) * scale + bias); K-tiled f32 accumulation in VMEM scratch."""
    @pl.when(pl.program_id(2) == 0)
    def _():
        acc_ref[...] = jnp.zeros_like(acc_ref)

    acc_ref[...] += jnp.dot(x_ref[...], w_ref[...],
                            preferred_element_type=jnp.float32)

    @pl.when(pl.program_id(2) == pl.num_programs(2) - 1)
    def _():
        y = acc_ref[...] * s_ref[...] + b_ref[...]
        if relu:
            y = jnp.maximum(y, 0.0)
        o_ref[...] = y.astype(o_ref.dtype)


def _matmul_res_kernel(x_ref, w_ref, s_ref, b_ref, r_ref, o_ref, acc_ref, *, relu):
    """o = act((x @ w) * scale + bias + residual)."""
    @pl.when(pl.program_id(2) == 0)
    def _():
        acc_ref[...] = jnp.zeros_like(acc_ref)

    acc_ref[...] += jnp.dot(x_ref[...], w_ref[...],
                            preferred_element_type=jnp.float32)

    @pl.when(pl.program_id(2) == pl.num_programs(2) - 1)
    def _():
        y = acc_ref[...] * s_ref[...] + b_ref[...] + r_ref[...].astype(jnp.float32)
        if relu:
            y = jnp.maximum(y, 0.0)
        o_ref[...] = y.astype(o_ref.dtype)


def _max_reduce_kernel(p_ref, o_ref):
    o_ref[...] = jnp.max(p_ref[...], axis=1)


# ---------------------------------------------------------------------------
# tile selection
# ---------------------------------------------------------------------------
def _choose_tiles(Mp, Kp, Np):
    # M tile
    tm = Mp if Mp <= 128 else _largest_divisor(Mp, 128, 16)
    gm = Mp // tm
    # N tile: keep >= 2 parallel tiles when gm == 1 (both v7x TensorCores get work);
    # stay <= 512 and 128-aligned (256/512 are also 256-aligned for the v6e/v7x MXU).
    if Np <= 128:
        tn = Np
    else:
        tn = min(Np // 2, 512) if gm == 1 else min(Np, 512)
        if tn % 128 != 0 or Np % tn != 0:
            tn = _largest_divisor(Np, 512, 128)
    # K tile: whole K when the double-buffered bf16 weight tile stays <= ~16 MiB
    # (well under the 32 MiB scoped budget on v7x, trivial on v5e/v6e).
    kcap = (8 * 1024 * 1024) // (2 * tn)
    if Kp <= kcap:
        tk = Kp
    else:
        align = 256 if Kp % 256 == 0 else 128
        tk = _largest_divisor(Kp, max(align, (kcap // align) * align), align)
    assert Mp % tm == 0 and Kp % tk == 0 and Np % tn == 0, (Mp, Kp, Np, tm, tk, tn)
    return tm, tk, tn


# ---------------------------------------------------------------------------
# fused matmul wrapper (conv-as-matmul + folded BN + residual + ReLU epilogue)
# ---------------------------------------------------------------------------
def fused_matmul(x, w_pad, scale_pad, bias_pad, residual=None, *, relu,
                 out_dtype=jnp.bfloat16, use_pallas=True):
    """act((x @ w) * scale + bias [+ residual]).

    x:         [M, K]    activations (cast to bf16 MXU operands; K <= Kp)
    w_pad:     [Kp, Np]  pre-padded bf16 weights (Kp, Np multiples of 128)
    scale/bias_pad: [1, Np] f32 folded-BN; padded columns are exactly 0
    residual:  [M, Np]   or None
    returns    [Mp, Np]  (rows beyond M are padding; caller slices)
    """
    M, K = x.shape
    Kp, Np = w_pad.shape
    assert K <= Kp
    Mp = _round_up(M, 16)

    xp = jnp.pad(x.astype(jnp.bfloat16), ((0, Mp - M), (0, Kp - K)))
    rp = None
    if residual is not None:
        rp = jnp.pad(residual.astype(jnp.bfloat16), ((0, Mp - M), (0, 0)))

    sp = scale_pad.astype(jnp.float32)
    bp = bias_pad.astype(jnp.float32)

    if not use_pallas:
        # Identical-math JAX reference (bf16 MXU operands, f32 accumulation).
        acc = jnp.dot(xp, w_pad, preferred_element_type=jnp.float32)
        y = acc * sp + bp
        if rp is not None:
            y = y + rp.astype(jnp.float32)
        if relu:
            y = jnp.maximum(y, 0.0)
        return y.astype(out_dtype)

    tm, tk, tn = _choose_tiles(Mp, Kp, Np)
    gm, gn, gk = Mp // tm, Np // tn, Kp // tk

    in_specs = [
        pl.BlockSpec((tm, tk), lambda i, j, k: (i, k)),
        pl.BlockSpec((tk, tn), lambda i, j, k: (k, j)),
        pl.BlockSpec((1, tn), lambda i, j, k: (0, j)),
        pl.BlockSpec((1, tn), lambda i, j, k: (0, j)),
    ]
    args = [xp, w_pad, sp, bp]
    if rp is None:
        kernel = functools.partial(_matmul_kernel, relu=relu)
    else:
        in_specs.append(pl.BlockSpec((tm, tn), lambda i, j, k: (i, j)))
        args.append(rp)
        kernel = functools.partial(_matmul_res_kernel, relu=relu)

    out_bytes = Mp * Np * (2 if out_dtype == jnp.bfloat16 else 4)
    bytes_accessed = (Mp * Kp + Kp * Np) * 2 + out_bytes + (Mp * Np * 2 if rp is not None else 0)
    cost = pl.CostEstimate(flops=2 * Mp * Np * Kp, transcendentals=0,
                           bytes_accessed=bytes_accessed)

    return pl.pallas_call(
        kernel,
        out_shape=jax.ShapeDtypeStruct((Mp, Np), out_dtype),
        grid_spec=pltpu.PrefetchScalarGridSpec(
            num_scalar_prefetch=0,
            grid=(gm, gn, gk),
            in_specs=in_specs,
            out_specs=pl.BlockSpec((tm, tn), lambda i, j, k: (i, j)),
            scratch_shapes=[pltpu.VMEM((tm, tn), jnp.float32)],
        ),
        compiler_params=_MATMUL_CPARAMS,
        cost_estimate=cost,
    )(*args)


# ---------------------------------------------------------------------------
# pooling kernels / glue
# ---------------------------------------------------------------------------
def max_reduce(p):
    """p:[M, KK, C] bf16 -> max over window axis -> [M, C] bf16; tiled over rows.

    C is a multiple of 128 (channel-padded activations) => lane-dense output stores.
    """
    M, KK, C = p.shape
    Mp = _round_up(M, 16)
    tm = Mp if Mp <= 512 else _largest_divisor(Mp, 512, 16)
    assert Mp % tm == 0
    pp = jnp.pad(p, ((0, Mp - M), (0, 0), (0, 0)))
    out = pl.pallas_call(
        _max_reduce_kernel,
        out_shape=jax.ShapeDtypeStruct((Mp, C), p.dtype),
        grid=(Mp // tm,),
        in_specs=[pl.BlockSpec((tm, KK, C), lambda i: (i, 0, 0))],
        out_specs=pl.BlockSpec((tm, C), lambda i: (i, 0)),
        compiler_params=pltpu.CompilerParams(
            dimension_semantics=("parallel",), vmem_limit_bytes=_VMEM_LIMIT),
    )(pp)
    return out[:M]


def _extract_patches(x, kh, kw, stride, pad, pad_value=0.0):
    """NHWC -> [N*OH*OW, kh*kw, C] patches (im2col glue).
    TODO(synk): move patch extraction into the matmul kernel (tap-axis grid)."""
    N, H, W, C = x.shape
    xp = jnp.pad(x, ((0, 0), (pad, pad), (pad, pad), (0, 0)),
                 constant_values=pad_value)
    OH = (H + 2 * pad - kh) // stride + 1
    OW = (W + 2 * pad - kw) // stride + 1
    cols = []
    for dy in range(kh):
        for dx in range(kw):
            cols.append(xp[:, dy:dy + stride * OH:stride, dx:dx + stride * OW:stride, :])
    patches = jnp.stack(cols, axis=3)            # [N, OH, OW, kh*kw, C]
    return patches.reshape(N * OH * OW, kh * kw, C), OH, OW


def conv_bn(x, cp, *, kh, kw, stride, pad, relu, residual=None, use_pallas=True):
    """conv (bias-free) + folded BN + optional residual + optional ReLU.

    x: [N, H, W, Cp_in] channel-padded bf16 activations.
    cp: {'w': [Kp, Np] bf16 (pre-padded), 's'/'b': [1, Np] f32}.
    Output: [N, OH, OW, Np] bf16 (padded channels stay exactly 0).
    """
    N = x.shape[0]
    patches, OH, OW = _extract_patches(x, kh, kw, stride, pad)
    M = N * OH * OW
    xm = patches.reshape(M, kh * kw * x.shape[-1])
    res = None if residual is None else residual.reshape(M, residual.shape[-1])
    out = fused_matmul(xm, cp["w"], cp["s"], cp["b"], res, relu=relu,
                       out_dtype=jnp.bfloat16, use_pallas=use_pallas)
    Np = cp["w"].shape[1]
    return out[:M].reshape(N, OH, OW, Np)


def maxpool_3x3_s2(x, *, use_pallas=True):
    N, H, W, C = x.shape
    patches, OH, OW = _extract_patches(x, 3, 3, 2, 1, pad_value=-jnp.inf)
    out = max_reduce(patches) if use_pallas else jnp.max(patches, axis=1)
    return out.reshape(N, OH, OW, C)


def global_avgpool(x):
    N, H, W, C = x.shape
    if H * W == 1:
        # With 32x32 inputs layer4's output is 1x1 spatially: adaptive-avg-pool((1,1))
        # is a reshape; no kernel launch / HBM round trip needed.
        return x.reshape(N, C).astype(jnp.float32)
    return jnp.mean(x.astype(jnp.float32), axis=(1, 2))   # glue fallback for larger inputs


# ---------------------------------------------------------------------------
# ResNet-18 forward
# ---------------------------------------------------------------------------
_LAYER_STRIDES = (1, 2, 2, 2)


def basic_block(x, p, *, stride, use_pallas):
    if "ds" in p:
        identity = conv_bn(x, p["ds"], kh=1, kw=1, stride=stride, pad=0,
                           relu=False, use_pallas=use_pallas)
    else:
        identity = x
    out = conv_bn(x, p["c1"], kh=3, kw=3, stride=stride, pad=1, relu=True,
                  use_pallas=use_pallas)
    out = conv_bn(out, p["c2"], kh=3, kw=3, stride=1, pad=1, relu=True,
                  residual=identity, use_pallas=use_pallas)
    return out


def resnet18_forward(x_nchw, params, *, num_classes, use_pallas=True):
    # NCHW (PyTorch convention) -> NHWC, bf16 activations.
    x = jnp.transpose(x_nchw.astype(jnp.float32), (0, 2, 3, 1)).astype(jnp.bfloat16)
    # stem: conv1(7x7, s2, p3, no bias) + bn1 + relu + maxpool(3x3, s2, p1)
    x = conv_bn(x, params["stem"], kh=7, kw=7, stride=2, pad=3, relu=True,
                use_pallas=use_pallas)
    x = maxpool_3x3_s2(x, use_pallas=use_pallas)
    # layer1..layer4 (2 BasicBlocks each)
    for layer, first_stride in zip(params["layers"], _LAYER_STRIDES):
        for bi, block in enumerate(layer):
            s = first_stride if bi == 0 else 1
            x = basic_block(x, block, stride=s, use_pallas=use_pallas)
    # head: adaptive avg pool (1,1) + fc (512 -> num_classes); f32 logits.
    feat = global_avgpool(x)                                  # [N, 512] f32
    logits = fused_matmul(feat, params["fc"]["w"], params["fc"]["s"], params["fc"]["b"],
                          None, relu=False, out_dtype=jnp.float32, use_pallas=use_pallas)
    return logits[:feat.shape[0], :num_classes]


# ---------------------------------------------------------------------------
# Parameters: weights pre-reshaped / pre-padded / pre-cast to bf16 ONCE at init.
# BatchNorm uses inference semantics; synthesized running stats folded into scale/bias.
# ---------------------------------------------------------------------------
def _conv_w(key, kh, kw, cin, cout):
    std = (2.0 / (kh * kw * cin)) ** 0.5
    return std * jax.random.normal(key, (kh, kw, cin, cout), jnp.float32)


def _bn_fold(key, c, eps=1e-5):
    k1, k2, k3, k4 = jax.random.split(key, 4)
    gamma = 1.0 + 0.1 * jax.random.normal(k1, (c,), jnp.float32)
    beta = 0.05 * jax.random.normal(k2, (c,), jnp.float32)
    mean = 0.05 * jax.random.normal(k3, (c,), jnp.float32)
    var = 1.0 + 0.1 * jnp.abs(jax.random.normal(k4, (c,), jnp.float32))
    scale = gamma / jnp.sqrt(var + eps)
    bias = beta - mean * scale
    return scale, bias


def _prep_conv(wkey, bnkey, kh, kw, cin, cout, cin_pad):
    """Build pre-padded bf16 [Kp, Np] matmul weights + padded f32 [1, Np] scale/bias.

    cin is padded to cin_pad per tap so the layout matches channel-padded activations;
    padded columns get scale = bias = 0 so the padded output channels are exactly 0."""
    w = _conv_w(wkey, kh, kw, cin, cout)
    scale, bias = _bn_fold(bnkey, cout)
    Np = _round_up(cout, 128)
    w = jnp.pad(w, ((0, 0), (0, 0), (0, cin_pad - cin), (0, Np - cout)))
    K = kh * kw * cin_pad
    Kp = _round_up(K, 128)
    wm = jnp.pad(w.reshape(K, Np), ((0, Kp - K), (0, 0))).astype(jnp.bfloat16)
    sp = jnp.pad(scale, (0, Np - cout)).reshape(1, Np).astype(jnp.float32)
    bp = jnp.pad(bias, (0, Np - cout)).reshape(1, Np).astype(jnp.float32)
    return {"w": wm, "s": sp, "b": bp}


def init_params(key, in_channels=1, num_classes=1000):
    keys = iter(jax.random.split(key, 64))
    p = {"stem": _prep_conv(next(keys), next(keys), 7, 7, in_channels, 64,
                            cin_pad=in_channels)}
    layer_cfg = [(64, 64, 1), (64, 128, 2), (128, 256, 2), (256, 512, 2)]
    layers = []
    for cin, cout, stride in layer_cfg:
        blocks = []
        for b in range(2):
            s = stride if b == 0 else 1
            ci = cin if b == 0 else cout
            ci_pad = _round_up(ci, 128)
            blk = {
                "c1": _prep_conv(next(keys), next(keys), 3, 3, ci, cout, cin_pad=ci_pad),
                "c2": _prep_conv(next(keys), next(keys), 3, 3, cout, cout,
                                 cin_pad=_round_up(cout, 128)),
            }
            if s != 1 or ci != cout:
                blk["ds"] = _prep_conv(next(keys), next(keys), 1, 1, ci, cout,
                                       cin_pad=ci_pad)
            blocks.append(blk)
        layers.append(blocks)
    p["layers"] = layers
    # FC head (bf16 MXU operands, f32 accumulation / logits).
    Ncp = _round_up(num_classes, 128)
    fc_w = (1.0 / 512 ** 0.5) * jax.random.normal(next(keys), (512, num_classes), jnp.float32)
    fc_b = 0.01 * jax.random.normal(next(keys), (num_classes,), jnp.float32)
    p["fc"] = {
        "w": jnp.pad(fc_w, ((0, 0), (0, Ncp - num_classes))).astype(jnp.bfloat16),
        "s": jnp.pad(jnp.ones((num_classes,), jnp.float32), (0, Ncp - num_classes)).reshape(1, Ncp),
        "b": jnp.pad(fc_b, (0, Ncp - num_classes)).reshape(1, Ncp),
    }
    return p


# ---------------------------------------------------------------------------
if __name__ == "__main__":
    key = jax.random.PRNGKey(0)
    pkey, xkey, tkey = jax.random.split(key, 3)
    num_classes = 1000
    params = init_params(pkey, in_channels=1, num_classes=num_classes)

    # ---- unit checks: each Pallas kernel vs the identical-math JAX op ------
    k1, k2, k3, k4 = jax.random.split(tkey, 4)
    xm = jax.random.normal(k1, (120, 640), jnp.float32)
    wm = (0.05 * jax.random.normal(k2, (640, 256), jnp.float32)).astype(jnp.bfloat16)
    sc = 1.0 + 0.1 * jax.random.normal(k3, (1, 256), jnp.float32)
    bi = 0.05 * jax.random.normal(k4, (1, 256), jnp.float32)
    rs = jax.random.normal(k4, (120, 256), jnp.float32).astype(jnp.bfloat16)

    got = fused_matmul(xm, wm, sc, bi, None, relu=True, out_dtype=jnp.float32, use_pallas=True)
    want = fused_matmul(xm, wm, sc, bi, None, relu=True, out_dtype=jnp.float32, use_pallas=False)
    assert bool(jnp.allclose(got, want, rtol=5e-3, atol=5e-3)), "fused_matmul mismatch"

    got_r = fused_matmul(xm, wm, sc, bi, rs, relu=True, out_dtype=jnp.float32, use_pallas=True)
    want_r = fused_matmul(xm, wm, sc, bi, rs, relu=True, out_dtype=jnp.float32, use_pallas=False)
    assert bool(jnp.allclose(got_r, want_r, rtol=5e-3, atol=5e-3)), "fused_matmul(res) mismatch"

    pm = jax.random.normal(k2, (100, 9, 128), jnp.float32).astype(jnp.bfloat16)
    assert bool(jnp.allclose(max_reduce(pm), jnp.max(pm, axis=1), rtol=0.0, atol=0.0)), \
        "max_reduce mismatch"

    # ---- end-to-end forward -------------------------------------------------
    # MyResNet default: in_channels=1; NCHW input like PyTorch.
    x = jax.random.normal(xkey, (2, 1, 32, 32), jnp.float32)
    fwd = jax.jit(functools.partial(resnet18_forward, num_classes=num_classes, use_pallas=True))
    ref_fwd = jax.jit(functools.partial(resnet18_forward, num_classes=num_classes, use_pallas=False))

    logits = jax.block_until_ready(fwd(x, params))
    assert logits.shape == (2, num_classes), logits.shape

    ref = jax.block_until_ready(ref_fwd(x, params))
    # Both paths use the same pre-padded bf16 weights and bf16-operand / f32-accumulate
    # matmuls; remaining differences are accumulation-order noise amplified by bf16
    # rounding of intermediate activations across 18 layers -> scale-relative budget.
    scale = max(1.0, float(jnp.max(jnp.abs(ref))))
    max_err = float(jnp.max(jnp.abs(logits - ref)))
    if not max_err <= 0.1 * scale:
        raise AssertionError(
            f"Pallas forward mismatch vs reference: max abs err={max_err}, scale={scale}")

    print("KERNEL_OK")
</pallas_src>

<mosaic_0001>
module attributes {stable_mosaic.version = 11 : i64} {
  func.func @_matmul_kernel(%arg0: i32, %arg1: i32, %arg2: i32, %arg3: memref<128x640xbf16, #tpu.memory_space<vmem>>, %arg4: memref<640x128xbf16, #tpu.memory_space<vmem>>, %arg5: memref<1x128xf32, #tpu.memory_space<vmem>>, %arg6: memref<1x128xf32, #tpu.memory_space<vmem>>, %arg7: memref<128x128xf32, #tpu.memory_space<vmem>>, %arg8: memref<128x128xf32, #tpu.memory_space<vmem>>) attributes {dimension_semantics = [#tpu.dimension_semantics<parallel>, #tpu.dimension_semantics<parallel>, #tpu.dimension_semantics<arbitrary>], iteration_bounds = array<i64: 1, 2, 1>, scalar_prefetch = 0 : i64, scratch_operands = 1 : i64, tpu.core_type = #tpu.core_type<tc>, window_params = [{transform_indices = @transform_0, window_bounds = array<i64: 128, 640>}, {transform_indices = @transform_1, window_bounds = array<i64: 640, 128>}, {transform_indices = @transform_2, window_bounds = array<i64: 1, 128>}, {transform_indices = @transform_3, window_bounds = array<i64: 1, 128>}, {transform_indices = @transform_4, window_bounds = array<i64: 128, 128>}]} {
    %c0_i32 = arith.constant 0 : i32
    %0 = arith.cmpi eq, %arg2, %c0_i32 : i32
    %1 = arith.extui %0 : i1 to i32
    %c0_i32_0 = arith.constant 0 : i32
    %2 = arith.cmpi ne, %1, %c0_i32_0 : i32
    scf.if %2 {
      %cst_10 = arith.constant 0.000000e+00 : f32
      %12 = vector.broadcast %cst_10 : f32 to vector<128x128xf32>
      %c0_11 = arith.constant 0 : index
      %c0_12 = arith.constant 0 : index
      %13 = vector.load %arg8[%c0_11, %c0_12] : memref<128x128xf32, #tpu.memory_space<vmem>>, vector<128x128xf32>
      tpu.vector_store %arg8[%c0_11, %c0_12], %12 {strides = array<i32>} : memref<128x128xf32, #tpu.memory_space<vmem>>, vector<128x128xf32>,
    } else {
    }
    %c0 = arith.constant 0 : index
    %c0_1 = arith.constant 0 : index
    %3 = vector.load %arg8[%c0, %c0_1] : memref<128x128xf32, #tpu.memory_space<vmem>>, vector<128x128xf32>
    %c0_2 = arith.constant 0 : index
    %c0_3 = arith.constant 0 : index
    %4 = vector.load %arg3[%c0_2, %c0_3] : memref<128x640xbf16, #tpu.memory_space<vmem>>, vector<128x640xbf16>
    %c0_4 = arith.constant 0 : index
    %c0_5 = arith.constant 0 : index
    %5 = vector.load %arg4[%c0_4, %c0_5] : memref<640x128xbf16, #tpu.memory_space<vmem>>, vector<640x128xbf16>
    %cst = arith.constant dense<0.000000e+00> : vector<128x128xf32>
    %6 = tpu.matmul %4, %5, %cst {dimension_numbers = #tpu.dot_dimension_numbers<[1], [0], [0], [1], [0, 0, 1, 1], [], []>} : vector<128x640xbf16>, vector<640x128xbf16>, vector<128x128xf32> -> vector<128x128xf32>
    %7 = arith.addf %3, %6 : vector<128x128xf32>
    %c0_6 = arith.constant 0 : index
    %c0_7 = arith.constant 0 : index
    %8 = vector.load %arg8[%c0_6, %c0_7] : memref<128x128xf32, #tpu.memory_space<vmem>>, vector<128x128xf32>
    tpu.vector_store %arg8[%c0_6, %c0_7], %7 {strides = array<i32>} : memref<128x128xf32, #tpu.memory_space<vmem>>, vector<128x128xf32>,
    %c0_i32_8 = arith.constant 0 : i32
    %9 = arith.cmpi eq, %arg2, %c0_i32_8 : i32
    %10 = arith.extui %9 : i1 to i32
    %c0_i32_9 = arith.constant 0 : i32
    %11 = arith.cmpi ne, %10, %c0_i32_9 : i32
    scf.if %11 {
      %c0_10 = arith.constant 0 : index
      %c0_11 = arith.constant 0 : index
      %12 = vector.load %arg8[%c0_10, %c0_11] : memref<128x128xf32, #tpu.memory_space<vmem>>, vector<128x128xf32>
      %c0_12 = arith.constant 0 : index
      %c0_13 = arith.constant 0 : index
      %13 = vector.load %arg5[%c0_12, %c0_13] : memref<1x128xf32, #tpu.memory_space<vmem>>, vector<1x128xf32>
      %14 = vector.broadcast %13 : vector<1x128xf32> to vector<128x128xf32>
      %15 = arith.mulf %12, %14 : vector<128x128xf32>
      %c0_14 = arith.constant 0 : index
      %c0_15 = arith.constant 0 : index
      %16 = vector.load %arg6[%c0_14, %c0_15] : memref<1x128xf32, #tpu.memory_space<vmem>>, vector<1x128xf32>
      %17 = vector.broadcast %16 : vector<1x128xf32> to vector<128x128xf32>
      %18 = arith.addf %15, %17 : vector<128x128xf32>
      %cst_16 = arith.constant 0.000000e+00 : f32
      %19 = vector.broadcast %cst_16 : f32 to vector<128x128xf32>
      %20 = arith.maximumf %18, %19 : vector<128x128xf32>
      %c0_17 = arith.constant 0 : index
      %c0_18 = arith.constant 0 : index
      %21 = vector.load %arg7[%c0_17, %c0_18] : memref<128x128xf32, #tpu.memory_space<vmem>>, vector<128x128xf32>
      tpu.vector_store %arg7[%c0_17, %c0_18], %20 {strides = array<i32>} : memref<128x128xf32, #tpu.memory_space<vmem>>, vector<128x128xf32>,
    } else {
    }
    return
  }
  func.func @transform_0(%arg0: i32, %arg1: i32, %arg2: i32) -> (i32, i32) {
    %c0_i32 = arith.constant 0 : i32
    return %arg0, %arg2 : i32, i32
  }
  func.func @transform_1(%arg0: i32, %arg1: i32, %arg2: i32) -> (i32, i32) {
    %c0_i32 = arith.constant 0 : i32
    return %arg2, %arg1 : i32, i32
  }
  func.func @transform_2(%arg0: i32, %arg1: i32, %arg2: i32) -> (i32, i32) {
    %c0_i32 = arith.constant 0 : i32
    %c0_i32_0 = arith.constant 0 : i32
    return %c0_i32, %arg1 : i32, i32
  }
  func.func @transform_3(%arg0: i32, %arg1: i32, %arg2: i32) -> (i32, i32) {
    %c0_i32 = arith.constant 0 : i32
    %c0_i32_0 = arith.constant 0 : i32
    return %c0_i32, %arg1 : i32, i32
  }
  func.func @transform_4(%arg0: i32, %arg1: i32, %arg2: i32) -> (i32, i32) {
    %c0_i32 = arith.constant 0 : i32
    return %arg0, %arg1 : i32, i32
  }
}

</mosaic_0001>

<llo_original>
// kernel: tpu_custom_call.1
$region0: #{tpu_custom_call.1}
  #allocation0 [shape = 'u32[]', space=smem, size = 0x4, offset = 0x4, fixed_abs, tag = 'smem constant byte address 0x4 - core index']
  #allocation1 [shape = 'u32[144,128]{1,0:T(1,128)}', space=vmem, size = 0x12000, scoped, tag = 'internal scratch']
  #allocation2 [shape = 'f32[128,128]{1,0:T(8,128)}', space=vmem, size = 0x10000, scoped, tag = 'scratch operand']
  %s0 = inlined_call_operand.hbm [shape: bf16[128,640], index: 0, kind: input, shape index: {}]
  %s1 = inlined_call_operand.hbm [shape: bf16[640,256], index: 1, kind: input, shape index: {}]
  %s2 = inlined_call_operand.vmem [shape: f32[1,256], index: 2, kind: input, shape index: {}]
  %s3 = inlined_call_operand.vmem [shape: f32[1,256], index: 3, kind: input, shape index: {}]
  %s4 = inlined_call_operand.hbm [shape: f32[128,256], index: 4, kind: output, shape index: {}]
  %s5 = sld [smem:[#allocation0]]
  $region65: #{tpu_custom_call.1} parent=0
    _
  %s7 = ssub.s32 1, %s5
  %s8 = scalar_select 0, %s7, %s5
  $region1: #{tpu_custom_call.1} parent=0
    #allocation3 [shape = 'u8[163840]{0}', space=vmem, size = 0x28000, scoped, tag = 'input window, operand 0, single buffered']
    #allocation4 [shape = 's32[2]{0}', space=sflag, size = 0x8, scoped, tag = 'scoped memory for tpu_custom_call.1']
    #allocation5 [shape = 's32[2]{0}', space=sflag, size = 0x8, scoped, tag = 'scoped memory for tpu_custom_call.1']
    #allocation6 [shape = 'u8[327680]{0}', space=vmem, size = 0x50000, scoped, tag = 'input window, operand 1']
    #allocation7 [shape = 's32[2]{0}', space=sflag, size = 0x8, scoped, tag = 'scoped memory for tpu_custom_call.1']
    #allocation8 [shape = 'u8[131072]{0}', space=vmem, size = 0x20000, scoped, tag = 'output window, operand 0']
    %9 = vsyncpa [#allocation4], 0
    %10 = vsyncpa [#allocation7], 0
    %s11 = scalar_lea.sflag [#allocation7], 1
    %12 = vsyncpa %s11, 0
    %13 = vsyncpa [#allocation5], 0
    %s14 = scalar_lea.sflag [#allocation5], 1
    %15 = vsyncpa %s14, 0
    loop: start=0, step=1, limit=4
    $region2: #{tpu_custom_call.1} parent=1 // loop_pre_header
      _
    $region3: #{tpu_custom_call.1} parent=1 // loop_header
      %s17 = sphi 0, %s21
      %p18 = scmp.ge.s32.totalorder %s17, 4
      %s24 = sphi 0, %s43
      %s25 = sphi 0, %s39
      %s26 = sphi 0, %s35
      %s27 = sphi 0, %s24
      %s28 = sphi 0, %s25
      %s29 = sphi 0, %s26
      %s30 = sphi 0, %s27
      %s31 = sphi 0, %s28
      %s32 = sphi 0, %s29
      %s48 = sphi 0, %s50
      %s51 = sphi 0, %s48
      %s52 = sphi 0, %s51
      %s68 = sphi 0, %s52
      %s76 = sphi 0, %s78
      %s79 = sphi 0, %s76
      %s80 = sphi 0, %s79
      %s96 = sphi 0, %s80
      %s102 = sphi 0, %s104
      %s105 = sphi 0, %s102
      %s106 = sphi 0, %s105
      %s122 = sphi 0, %s106
      %s128 = sphi 0, %s130
      %s131 = sphi 0, %s128
      %s132 = sphi 0, %s131
      %s148 = sphi 0, %s132
      %s156 = sphi 0, %s158
      %s159 = sphi 0, %s156
      %s160 = sphi 0, %s159
      %s176 = sphi 0, %s160
    $region4: #{tpu_custom_call.1} parent=1 // loop_header_branch
      %20 = sbr.rel (%p18) target = $region8
    $region5: #{tpu_custom_call.1} parent=1 // loop_body
      %s22 = ssub.s32 %s17, 1
      %s23 = ssub.s32 %s17, 2
      %s33 = sadd.s32 1, %s26
      %p34 = scmp.ge.s32.totalorder %s33, 1
      %s35 = scalar_select %p34, 0, %s33
      %s36 = sadd.s32 1, %s25
      %s37 = scalar_select %p34, %s36, %s25
      %p38 = scmp.ge.s32.totalorder %s37, 2
      %s39 = scalar_select %p38, 0, %s37
      %s40 = sadd.s32 1, %s24
      %s41 = scalar_select %p38, %s40, %s24
      %p42 = scmp.ge.s32.totalorder %s41, 1
      %s43 = scalar_select %p42, 0, %s41
      %s44 = ssub.s32 %s24, %s43
      %s45 = ssub.s32 %s26, %s35
      %s46 = sor.u32 %s44, %s45
      %p47 = scmp.eq.s32.totalorder %s46, 0
      %s49 = sadd.s32 %s48, 1
      %s50 = scalar_select %p47, %s48, %s49
      %p53 = pneg %p47
      %p54 = scmp.eq.s32.totalorder %s17, 1
      %p55 = por %p53, %p54
      %p56 = scmp.ne.s32.totalorder %s48, %s51
      %p57 = scmp.eq.s32.totalorder %s17, 0
      %p58 = por %p56, %p57
      %p59 = scmp.ne.s32.totalorder %s48, %s51
      %p60 = scmp.eq.s32.totalorder %s22, 1
      %p61 = por %p59, %p60
      %p62 = scmp.ne.s32.totalorder %s51, %s52
      %p63 = scmp.eq.s32.totalorder %s22, 0
      %p64 = por %p62, %p63
      %p65 = scmp.ne.s32.totalorder %s51, %s52
      %p66 = scmp.eq.s32.totalorder %s23, 1
      %p67 = por %p65, %p66
      %p69 = scmp.ne.s32.totalorder %s52, %s68
      %p70 = scmp.eq.s32.totalorder %s23, 0
      %p71 = por %p69, %p70
      %s72 = ssub.s32 %s26, %s35
      %s73 = ssub.s32 %s25, %s39
      %s74 = sor.u32 %s72, %s73
      %p75 = scmp.eq.s32.totalorder %s74, 0
      %s77 = sadd.s32 %s76, 1
      %s78 = scalar_select %p75, %s76, %s77
      %p81 = pneg %p75
      %p82 = scmp.eq.s32.totalorder %s17, 1
      %p83 = por %p81, %p82
      %p84 = scmp.ne.s32.totalorder %s76, %s79
      %p85 = scmp.eq.s32.totalorder %s17, 0
      %p86 = por %p84, %p85
      %p87 = scmp.ne.s32.totalorder %s76, %s79
      %p88 = scmp.eq.s32.totalorder %s22, 1
      %p89 = por %p87, %p88
      %p90 = scmp.ne.s32.totalorder %s79, %s80
      %p91 = scmp.eq.s32.totalorder %s22, 0
      %p92 = por %p90, %p91
      %p93 = scmp.ne.s32.totalorder %s79, %s80
      %p94 = scmp.eq.s32.totalorder %s23, 1
      %p95 = por %p93, %p94
      %p97 = scmp.ne.s32.totalorder %s80, %s96
      %p98 = scmp.eq.s32.totalorder %s23, 0
      %p99 = por %p97, %p98
      %s100 = ssub.s32 %s25, %s39
      %p101 = scmp.eq.s32.totalorder %s100, 0
      %s103 = sadd.s32 %s102, 1
      %s104 = scalar_select %p101, %s102, %s103
      %p107 = pneg %p101
      %p108 = scmp.eq.s32.totalorder %s17, 1
      %p109 = por %p107, %p108
      %p110 = scmp.ne.s32.totalorder %s102, %s105
      %p111 = scmp.eq.s32.totalorder %s17, 0
      %p112 = por %p110, %p111
      %p113 = scmp.ne.s32.totalorder %s102, %s105
      %p114 = scmp.eq.s32.totalorder %s22, 1
      %p115 = por %p113, %p114
      %p116 = scmp.ne.s32.totalorder %s105, %s106
      %p117 = scmp.eq.s32.totalorder %s22, 0
      %p118 = por %p116, %p117
      %p119 = scmp.ne.s32.totalorder %s105, %s106
      %p120 = scmp.eq.s32.totalorder %s23, 1
      %p121 = por %p119, %p120
      %p123 = scmp.ne.s32.totalorder %s106, %s122
      %p124 = scmp.eq.s32.totalorder %s23, 0
      %p125 = por %p123, %p124
      %s126 = ssub.s32 %s25, %s39
      %p127 = scmp.eq.s32.totalorder %s126, 0
      %s129 = sadd.s32 %s128, 1
      %s130 = scalar_select %p127, %s128, %s129
      %p133 = pneg %p127
      %p134 = scmp.eq.s32.totalorder %s17, 1
      %p135 = por %p133, %p134
      %p136 = scmp.ne.s32.totalorder %s128, %s131
      %p137 = scmp.eq.s32.totalorder %s17, 0
      %p138 = por %p136, %p137
      %p139 = scmp.ne.s32.totalorder %s128, %s131
      %p140 = scmp.eq.s32.totalorder %s22, 1
      %p141 = por %p139, %p140
      %p142 = scmp.ne.s32.totalorder %s131, %s132
      %p143 = scmp.eq.s32.totalorder %s22, 0
      %p144 = por %p142, %p143
      %p145 = scmp.ne.s32.totalorder %s131, %s132
      %p146 = scmp.eq.s32.totalorder %s23, 1
      %p147 = por %p145, %p146
      %p149 = scmp.ne.s32.totalorder %s132, %s148
      %p150 = scmp.eq.s32.totalorder %s23, 0
      %p151 = por %p149, %p150
      %s152 = ssub.s32 %s24, %s43
      %s153 = ssub.s32 %s25, %s39
      %s154 = sor.u32 %s152, %s153
      %p155 = scmp.eq.s32.totalorder %s154, 0
      %s157 = sadd.s32 %s156, 1
      %s158 = scalar_select %p155, %s156, %s157
      %p161 = pneg %p155
      %p162 = scmp.eq.s32.totalorder %s17, 1
      %p163 = por %p161, %p162
      %p164 = scmp.ne.s32.totalorder %s156, %s159
      %p165 = scmp.eq.s32.totalorder %s17, 0
      %p166 = por %p164, %p165
      %p167 = scmp.ne.s32.totalorder %s156, %s159
      %p168 = scmp.eq.s32.totalorder %s22, 1
      %p169 = por %p167, %p168
      %p170 = scmp.ne.s32.totalorder %s159, %s160
      %p171 = scmp.eq.s32.totalorder %s22, 0
      %p172 = por %p170, %p171
      %p173 = scmp.ne.s32.totalorder %s159, %s160
      %p174 = scmp.eq.s32.totalorder %s23, 1
      %p175 = por %p173, %p174
      %p177 = scmp.ne.s32.totalorder %s160, %s176
      %p178 = scmp.eq.s32.totalorder %s23, 0
      %p179 = por %p177, %p178
      %p180 = scmp.le.s32.totalorder 1, %s17
      %p181 = scmp.lt.s32.totalorder %s17, 3
      %p182 = pnand %p180, %p181
      %p183 = pneg %p182
      // Predicated region
      $region9: #{tpu_custom_call.1} parent=5 // pred_check
        _
      $region10: #{tpu_custom_call.1} parent=5 // pred_check_branch
        %185 = sbr.rel (%p182) target = $region12
      $region11: #{tpu_custom_call.1} parent=5 // pred_region
        %s186 = ssub.s32 %s17, 1
        // Predicated region
        $region13: #{tpu_custom_call.1} parent=11 // pred_check
          %p187 = pneg %p64
        $region14: #{tpu_custom_call.1} parent=11 // pred_check_branch
          %189 = sbr.rel (%p187) target = $region16
        $region15: #{tpu_custom_call.1} parent=11 // pred_region
          %s190 = smul.u32 16, %s27
          %s191 = smul.u32 5, %s29
          %s193 = ssub.s32 5120, 5120
          %194 = vsyncadd [#allocation4], %s193
          %s195 = smul.addr %s190, 5
          %s196 = sadd.s32 %s191, %s195
          %s197 = smul.addr %s196, 64
          %s198 = scalar_lea.hbm %s0, %s197
          %s199 = sshll.u32 [#allocation3], 4
          %s200 = int_to_ptr.vmem [resolvable:$true] %s199
          %205 = dma.hbm_to_vmem [thread:$0]  %s198, 5120, %s200, [#allocation4], 320, 320, 20
        $region16: #{tpu_custom_call.1} parent=11 // pred_fallthru
          _
      $region12: #{tpu_custom_call.1} parent=5 // pred_fallthru
        _
      %p206 = scmp.lt.s32.totalorder %s17, 2
      // Predicated region
      $region17: #{tpu_custom_call.1} parent=5 // pred_check
        %p207 = pneg %p206
      $region18: #{tpu_custom_call.1} parent=5 // pred_check_branch
        %209 = sbr.rel (%p207) target = $region20
      $region19: #{tpu_custom_call.1} parent=5 // pred_region
        // Predicated region
        $region21: #{tpu_custom_call.1} parent=19 // pred_check
          %p210 = pneg %p86
        $region22: #{tpu_custom_call.1} parent=19 // pred_check_branch
          %212 = sbr.rel (%p210) target = $region24
        $region23: #{tpu_custom_call.1} parent=19 // pred_region
          %s213 = sand.u32 %s76, 1
          %s214 = scalar_lea.sflag [#allocation7], %s213
          %s215 = sand.u32 %s76, 1
          %s216 = smul.addr %s215, 320
          %s217 = scalar_lea.vmem [#allocation6], %s216
          %s218 = smul.u32 80, %s26
          %s220 = ssub.s32 5120, 5120
          %221 = vsyncadd %s214, %s220
          %s222 = smul.addr %s218, 2
          %s223 = sadd.s32 %s25, %s222
          %s224 = smul.addr %s223, 64
          %s225 = scalar_lea.hbm %s1, %s224
          %s226 = sshll.u32 %s217, 4
          %s227 = int_to_ptr.vmem [resolvable:$true] %s226
          %232 = dma.hbm_to_vmem [thread:$0]  %s225, 5120, %s227, %s214, 128, 64, 4
        $region24: #{tpu_custom_call.1} parent=19 // pred_fallthru
          _
        // Predicated region
        $region25: #{tpu_custom_call.1} parent=19 // pred_check
          %p233 = pneg %p112
        $region26: #{tpu_custom_call.1} parent=19 // pred_check_branch
          %235 = sbr.rel (%p233) target = $region28
        $region27: #{tpu_custom_call.1} parent=19 // pred_region
          %p236 = scmp.lt.s32.totalorder %s25, 1
          %s237 = scalar_select %p236, %s25, 1
          %s238 = scalar_lea.vmem %s2, %s237
        $region28: #{tpu_custom_call.1} parent=19 // pred_fallthru
          _
        // Predicated region
        $region29: #{tpu_custom_call.1} parent=19 // pred_check
          %p239 = pneg %p138
        $region30: #{tpu_custom_call.1} parent=19 // pred_check_branch
          %241 = sbr.rel (%p239) target = $region32
        $region31: #{tpu_custom_call.1} parent=19 // pred_region
          %p242 = scmp.lt.s32.totalorder %s25, 1
          %s243 = scalar_select %p242, %s25, 1
          %s244 = scalar_lea.vmem %s3, %s243
        $region32: #{tpu_custom_call.1} parent=19 // pred_fallthru
          _
      $region20: #{tpu_custom_call.1} parent=5 // pred_fallthru
        _
      %p245 = scmp.le.s32.totalorder 1, %s17
      %p246 = scmp.lt.s32.totalorder %s17, 3
      %p247 = pnand %p245, %p246
      %p248 = pneg %p247
      // Predicated region
      $region33: #{tpu_custom_call.1} parent=5 // pred_check
        _
      $region34: #{tpu_custom_call.1} parent=5 // pred_check_branch
        %250 = sbr.rel (%p247) target = $region36
      $region35: #{tpu_custom_call.1} parent=5 // pred_region
        %s251 = ssub.s32 %s17, 1
        // Predicated region
        $region37: #{tpu_custom_call.1} parent=35 // pred_check
          %p252 = pneg %p64
        $region38: #{tpu_custom_call.1} parent=35 // pred_check_branch
          %254 = sbr.rel (%p252) target = $region40
        $region39: #{tpu_custom_call.1} parent=35 // pred_region
          %255 = dma.done [#allocation4], 5120
        $region40: #{tpu_custom_call.1} parent=35 // pred_fallthru
          _
        %s256 = sand.u32 %s79, 1
        %s257 = scalar_lea.sflag [#allocation7], %s256
        %s258 = sand.u32 %s79, 1
        %s259 = smul.addr %s258, 320
        %s260 = scalar_lea.vmem [#allocation6], %s259
        // Predicated region
        $region41: #{tpu_custom_call.1} parent=35 // pred_check
          %p261 = pneg %p92
        $region42: #{tpu_custom_call.1} parent=35 // pred_check_branch
          %263 = sbr.rel (%p261) target = $region44
        $region43: #{tpu_custom_call.1} parent=35 // pred_region
          %264 = dma.done %s257, 5120
        $region44: #{tpu_custom_call.1} parent=35 // pred_fallthru
          _
        %p265 = pneg %p64
        %p266 = pneg %p61
        %s267 = sand.u32 %s79, 1
        %s268 = scalar_lea.sflag [#allocation7], %s267
        %s269 = sand.u32 %s79, 1
        %s270 = smul.addr %s269, 320
        %s271 = scalar_lea.vmem [#allocation6], %s270
        %p272 = pneg %p92
        %p273 = pneg %p89
        %p274 = scmp.lt.s32.totalorder %s28, 1
        %s275 = scalar_select %p274, %s28, 1
        %s276 = scalar_lea.vmem %s2, %s275
        %p277 = pneg %p118
        %p278 = pneg %p115
        %p279 = scmp.lt.s32.totalorder %s28, 1
        %s280 = scalar_select %p279, %s28, 1
        %s281 = scalar_lea.vmem %s3, %s280
        %p282 = pneg %p144
        %p283 = pneg %p141
        %p284 = pneg %p172
        %p285 = pneg %p169
        %s286 = sand.u32 %s159, 1
        %s287 = scalar_lea.sflag [#allocation5], %s286
        %s288 = sand.u32 %s159, 1
        %s289 = smul.addr %s288, 128
        %s290 = scalar_lea.vmem [#allocation8], %s289
        %s291 = smul.u32 16, %s27
        %s292 = smul.u32 5, %s29
        %s293 = smul.u32 80, %s29
        %p294 = scmp.lt.s32.totalorder %s28, 1
        %s295 = scalar_select %p294, %s28, 1
        %s296 = scalar_lea.vmem %s2, %s295
        %p297 = scmp.lt.s32.totalorder %s28, 1
        %s298 = scalar_select %p297, %s28, 1
        %s299 = scalar_lea.vmem %s3, %s298
        %s300 = smul.u32 16, %s27
        %p302 = scmp.eq.s32.totalorder %s29, 0
        // Predicated region
        $region45: #{tpu_custom_call.1} parent=35 // pred_check
          %p303 = pneg %p302
        $region46: #{tpu_custom_call.1} parent=35 // pred_check_branch
          %305 = sbr.rel (%p303) target = $region48
        $region47: #{tpu_custom_call.1} parent=35 // pred_region
          %306 = vst [vmem:[#allocation2] sm:$0xff] 0.0
          %307 = vst [vmem:[#allocation2 + $0x8] sm:$0xff] 0.0
          %308 = vst [vmem:[#allocation2 + $0x10] sm:$0xff] 0.0
          %309 = vst [vmem:[#allocation2 + $0x18] sm:$0xff] 0.0
          %310 = vst [vmem:[#allocation2 + $0x20] sm:$0xff] 0.0
          %311 = vst [vmem:[#allocation2 + $0x28] sm:$0xff] 0.0
          %312 = vst [vmem:[#allocation2 + $0x30] sm:$0xff] 0.0
          %313 = vst [vmem:[#allocation2 + $0x38] sm:$0xff] 0.0
          %314 = vst [vmem:[#allocation2 + $0x40] sm:$0xff] 0.0
          %315 = vst [vmem:[#allocation2 + $0x48] sm:$0xff] 0.0
          %316 = vst [vmem:[#allocation2 + $0x50] sm:$0xff] 0.0
          %317 = vst [vmem:[#allocation2 + $0x58] sm:$0xff] 0.0
          %318 = vst [vmem:[#allocation2 + $0x60] sm:$0xff] 0.0
          %319 = vst [vmem:[#allocation2 + $0x68] sm:$0xff] 0.0
          %320 = vst [vmem:[#allocation2 + $0x70] sm:$0xff] 0.0
          %321 = vst [vmem:[#allocation2 + $0x78] sm:$0xff] 0.0
        $region48: #{tpu_custom_call.1} parent=35 // pred_fallthru
          _
        %v322 = vld [vmem:[#allocation2] sm:$0xff]
        %v323 = vld [vmem:[#allocation2 + $0x8] sm:$0xff]
        %v324 = vld [vmem:[#allocation2 + $0x10] sm:$0xff]
        %v325 = vld [vmem:[#allocation2 + $0x18] sm:$0xff]
        %v326 = vld [vmem:[#allocation2 + $0x20] sm:$0xff]
        %v327 = vld [vmem:[#allocation2 + $0x28] sm:$0xff]
        %v328 = vld [vmem:[#allocation2 + $0x30] sm:$0xff]
        %v329 = vld [vmem:[#allocation2 + $0x38] sm:$0xff]
        %v330 = vld [vmem:[#allocation2 + $0x40] sm:$0xff]
        %v331 = vld [vmem:[#allocation2 + $0x48] sm:$0xff]
        %v332 = vld [vmem:[#allocation2 + $0x50] sm:$0xff]
        %v333 = vld [vmem:[#allocation2 + $0x58] sm:$0xff]
        %v334 = vld [vmem:[#allocation2 + $0x60] sm:$0xff]
        %v335 = vld [vmem:[#allocation2 + $0x68] sm:$0xff]
        %v336 = vld [vmem:[#allocation2 + $0x70] sm:$0xff]
        %v337 = vld [vmem:[#allocation2 + $0x78] sm:$0xff]
        %v338 = vld [vmem:[#allocation3] sm:$0xff]
        %v339 = vld [vmem:[#allocation3 + $0x8] sm:$0xff]
        %v340 = vld [vmem:[#allocation3 + $0x10] sm:$0xf]
        %v341 = vld [vmem:[#allocation3 + $0x14] sm:$0xff]
        %v342 = vld [vmem:[#allocation3 + $0x1c] sm:$0xff]
        %v343 = vld [vmem:[#allocation3 + $0x24] sm:$0xf]
        %v344 = vld [vmem:[#allocation3 + $0x28] sm:$0xff]
        %v345 = vld [vmem:[#allocation3 + $0x30] sm:$0xff]
        %v346 = vld [vmem:[#allocation3 + $0x38] sm:$0xf]
        %v347 = vld [vmem:[#allocation3 + $0x3c] sm:$0xff]
        %v348 = vld [vmem:[#allocation3 + $0x44] sm:$0xff]
        %v349 = vld [vmem:[#allocation3 + $0x4c] sm:$0xf]
        %v350 = vld [vmem:[#allocation3 + $0x50] sm:$0xff]
        %v351 = vld [vmem:[#allocation3 + $0x58] sm:$0xff]
        %v352 = vld [vmem:[#allocation3 + $0x60] sm:$0xf]
        %v353 = vld [vmem:[#allocation3 + $0x64] sm:$0xff]
        %v354 = vld [vmem:[#allocation3 + $0x6c] sm:$0xff]
        %v355 = vld [vmem:[#allocation3 + $0x74] sm:$0xf]
        %v356 = vld [vmem:[#allocation3 + $0x78] sm:$0xff]
        %v357 = vld [vmem:[#allocation3 + $0x80] sm:$0xff]
        %v358 = vld [vmem:[#allocation3 + $0x88] sm:$0xf]
        %v359 = vld [vmem:[#allocation3 + $0x8c] sm:$0xff]
        %v360 = vld [vmem:[#allocation3 + $0x94] sm:$0xff]
        %v361 = vld [vmem:[#allocation3 + $0x9c] sm:$0xf]
        %v362 = vld [vmem:[#allocation3 + $0xa0] sm:$0xff]
        %v363 = vld [vmem:[#allocation3 + $0xa8] sm:$0xff]
        %v364 = vld [vmem:[#allocation3 + $0xb0] sm:$0xf]
        %v365 = vld [vmem:[#allocation3 + $0xb4] sm:$0xff]
        %v366 = vld [vmem:[#allocation3 + $0xbc] sm:$0xff]
        %v367 = vld [vmem:[#allocation3 + $0xc4] sm:$0xf]
        %v368 = vld [vmem:[#allocation3 + $0xc8] sm:$0xff]
        %v369 = vld [vmem:[#allocation3 + $0xd0] sm:$0xff]
        %v370 = vld [vmem:[#allocation3 + $0xd8] sm:$0xf]
        %v371 = vld [vmem:[#allocation3 + $0xdc] sm:$0xff]
        %v372 = vld [vmem:[#allocation3 + $0xe4] sm:$0xff]
        %v373 = vld [vmem:[#allocation3 + $0xec] sm:$0xf]
        %v374 = vld [vmem:[#allocation3 + $0xf0] sm:$0xff]
        %v375 = vld [vmem:[#allocation3 + $0xf8] sm:$0xff]
        %v376 = vld [vmem:[#allocation3 + $0x100] sm:$0xf]
        %v377 = vld [vmem:[#allocation3 + $0x104] sm:$0xff]
        %v378 = vld [vmem:[#allocation3 + $0x10c] sm:$0xff]
        %v379 = vld [vmem:[#allocation3 + $0x114] sm:$0xf]
        %v380 = vld [vmem:[#allocation3 + $0x118] sm:$0xff]
        %v381 = vld [vmem:[#allocation3 + $0x120] sm:$0xff]
        %v382 = vld [vmem:[#allocation3 + $0x128] sm:$0xf]
        %v383 = vld [vmem:[#allocation3 + $0x12c] sm:$0xff]
        %v384 = vld [vmem:[#allocation3 + $0x134] sm:$0xff]
        %v385 = vld [vmem:[#allocation3 + $0x13c] sm:$0xf]
        %v386 = vld [vmem:[%s260] sm:$0xf]
        %v387 = vld [vmem:[%s260 + $0x4] sm:$0xf]
        %v388 = vld [vmem:[%s260 + $0x8] sm:$0xf]
        %v389 = vld [vmem:[%s260 + $0xc] sm:$0xf]
        %v390 = vld [vmem:[%s260 + $0x10] sm:$0xf]
        %v391 = vld [vmem:[%s260 + $0x14] sm:$0xf]
        %v392 = vld [vmem:[%s260 + $0x18] sm:$0xf]
        %v393 = vld [vmem:[%s260 + $0x1c] sm:$0xf]
        %v394 = vld [vmem:[%s260 + $0x20] sm:$0xf]
        %v395 = vld [vmem:[%s260 + $0x24] sm:$0xf]
        %v396 = vld [vmem:[%s260 + $0x28] sm:$0xf]
        %v397 = vld [vmem:[%s260 + $0x2c] sm:$0xf]
        %v398 = vld [vmem:[%s260 + $0x30] sm:$0xf]
        %v399 = vld [vmem:[%s260 + $0x34] sm:$0xf]
        %v400 = vld [vmem:[%s260 + $0x38] sm:$0xf]
        %v401 = vld [vmem:[%s260 + $0x3c] sm:$0xf]
        %v402 = vld [vmem:[%s260 + $0x40] sm:$0xf]
        %v403 = vld [vmem:[%s260 + $0x44] sm:$0xf]
        %v404 = vld [vmem:[%s260 + $0x48] sm:$0xf]
        %v405 = vld [vmem:[%s260 + $0x4c] sm:$0xf]
        %v406 = vld [vmem:[%s260 + $0x50] sm:$0xf]
        %v407 = vld [vmem:[%s260 + $0x54] sm:$0xf]
        %v408 = vld [vmem:[%s260 + $0x58] sm:$0xf]
        %v409 = vld [vmem:[%s260 + $0x5c] sm:$0xf]
        %v410 = vld [vmem:[%s260 + $0x60] sm:$0xf]
        %v411 = vld [vmem:[%s260 + $0x64] sm:$0xf]
        %v412 = vld [vmem:[%s260 + $0x68] sm:$0xf]
        %v413 = vld [vmem:[%s260 + $0x6c] sm:$0xf]
        %v414 = vld [vmem:[%s260 + $0x70] sm:$0xf]
        %v415 = vld [vmem:[%s260 + $0x74] sm:$0xf]
        %v416 = vld [vmem:[%s260 + $0x78] sm:$0xf]
        %v417 = vld [vmem:[%s260 + $0x7c] sm:$0xf]
        %v418 = vld [vmem:[%s260 + $0x80] sm:$0xf]
        %v419 = vld [vmem:[%s260 + $0x84] sm:$0xf]
        %v420 = vld [vmem:[%s260 + $0x88] sm:$0xf]
        %v421 = vld [vmem:[%s260 + $0x8c] sm:$0xf]
        %v422 = vld [vmem:[%s260 + $0x90] sm:$0xf]
        %v423 = vld [vmem:[%s260 + $0x94] sm:$0xf]
        %v424 = vld [vmem:[%s260 + $0x98] sm:$0xf]
        %v425 = vld [vmem:[%s260 + $0x9c] sm:$0xf]
        %v426 = vld [vmem:[%s260 + $0xa0] sm:$0xf]
        %v427 = vld [vmem:[%s260 + $0xa4] sm:$0xf]
        %v428 = vld [vmem:[%s260 + $0xa8] sm:$0xf]
        %v429 = vld [vmem:[%s260 + $0xac] sm:$0xf]
        %v430 = vld [vmem:[%s260 + $0xb0] sm:$0xf]
        %v431 = vld [vmem:[%s260 + $0xb4] sm:$0xf]
        %v432 = vld [vmem:[%s260 + $0xb8] sm:$0xf]
        %v433 = vld [vmem:[%s260 + $0xbc] sm:$0xf]
        %v434 = vld [vmem:[%s260 + $0xc0] sm:$0xf]
        %v435 = vld [vmem:[%s260 + $0xc4] sm:$0xf]
        %v436 = vld [vmem:[%s260 + $0xc8] sm:$0xf]
        %v437 = vld [vmem:[%s260 + $0xcc] sm:$0xf]
        %v438 = vld [vmem:[%s260 + $0xd0] sm:$0xf]
        %v439 = vld [vmem:[%s260 + $0xd4] sm:$0xf]
        %v440 = vld [vmem:[%s260 + $0xd8] sm:$0xf]
        %v441 = vld [vmem:[%s260 + $0xdc] sm:$0xf]
        %v442 = vld [vmem:[%s260 + $0xe0] sm:$0xf]
        %v443 = vld [vmem:[%s260 + $0xe4] sm:$0xf]
        %v444 = vld [vmem:[%s260 + $0xe8] sm:$0xf]
        %v445 = vld [vmem:[%s260 + $0xec] sm:$0xf]
        %v446 = vld [vmem:[%s260 + $0xf0] sm:$0xf]
        %v447 = vld [vmem:[%s260 + $0xf4] sm:$0xf]
        %v448 = vld [vmem:[%s260 + $0xf8] sm:$0xf]
        %v449 = vld [vmem:[%s260 + $0xfc] sm:$0xf]
        %v450 = vld [vmem:[%s260 + $0x100] sm:$0xf]
        %v451 = vld [vmem:[%s260 + $0x104] sm:$0xf]
        %v452 = vld [vmem:[%s260 + $0x108] sm:$0xf]
        %v453 = vld [vmem:[%s260 + $0x10c] sm:$0xf]
        %v454 = vld [vmem:[%s260 + $0x110] sm:$0xf]
        %v455 = vld [vmem:[%s260 + $0x114] sm:$0xf]
        %v456 = vld [vmem:[%s260 + $0x118] sm:$0xf]
        %v457 = vld [vmem:[%s260 + $0x11c] sm:$0xf]
        %v458 = vld [vmem:[%s260 + $0x120] sm:$0xf]
        %v459 = vld [vmem:[%s260 + $0x124] sm:$0xf]
        %v460 = vld [vmem:[%s260 + $0x128] sm:$0xf]
        %v461 = vld [vmem:[%s260 + $0x12c] sm:$0xf]
        %v462 = vld [vmem:[%s260 + $0x130] sm:$0xf]
        %v463 = vld [vmem:[%s260 + $0x134] sm:$0xf]
        %v464 = vld [vmem:[%s260 + $0x138] sm:$0xf]
        %v465 = vld [vmem:[%s260 + $0x13c] sm:$0xf]
        %v514 = vunpack.c.l.b16 %v338
        %v515 = vunpack.c.h.b16 %v338
        %v516 = vunpack.c.l.b16 %v339
        %v517 = vunpack.c.h.b16 %v339
        %v518 = vunpack.c.l.b16 %v340
        %v519 = vunpack.c.l.b16 %v341
        %v520 = vunpack.c.h.b16 %v341
        %v521 = vunpack.c.l.b16 %v342
        %v522 = vunpack.c.h.b16 %v342
        %v523 = vunpack.c.l.b16 %v343
        %v524 = vunpack.c.l.b16 %v344
        %v525 = vunpack.c.h.b16 %v344
        %v526 = vunpack.c.l.b16 %v345
        %v527 = vunpack.c.h.b16 %v345
        %v528 = vunpack.c.l.b16 %v346
        %v529 = vunpack.c.l.b16 %v347
        %v530 = vunpack.c.h.b16 %v347
        %v531 = vunpack.c.l.b16 %v348
        %v532 = vunpack.c.h.b16 %v348
        %v533 = vunpack.c.l.b16 %v349
        %v534 = vunpack.c.l.b16 %v350
        %v535 = vunpack.c.h.b16 %v350
        %v536 = vunpack.c.l.b16 %v351
        %v537 = vunpack.c.h.b16 %v351
        %v538 = vunpack.c.l.b16 %v352
        %v539 = vunpack.c.l.b16 %v353
        %v540 = vunpack.c.h.b16 %v353
        %v541 = vunpack.c.l.b16 %v354
        %v542 = vunpack.c.h.b16 %v354
        %v543 = vunpack.c.l.b16 %v355
        %v544 = vunpack.c.l.b16 %v356
        %v545 = vunpack.c.h.b16 %v356
        %v546 = vunpack.c.l.b16 %v357
        %v547 = vunpack.c.h.b16 %v357
        %v548 = vunpack.c.l.b16 %v358
        %v549 = vunpack.c.l.b16 %v359
        %v550 = vunpack.c.h.b16 %v359
        %v551 = vunpack.c.l.b16 %v360
        %v552 = vunpack.c.h.b16 %v360
        %v553 = vunpack.c.l.b16 %v361
        %v554 = vunpack.c.l.b16 %v362
        %v555 = vunpack.c.h.b16 %v362
        %v556 = vunpack.c.l.b16 %v363
        %v557 = vunpack.c.h.b16 %v363
        %v558 = vunpack.c.l.b16 %v364
        %v559 = vunpack.c.l.b16 %v365
        %v560 = vunpack.c.h.b16 %v365
        %v561 = vunpack.c.l.b16 %v366
        %v562 = vunpack.c.h.b16 %v366
        %v563 = vunpack.c.l.b16 %v367
        %v564 = vunpack.c.l.b16 %v368
        %v565 = vunpack.c.h.b16 %v368
        %v566 = vunpack.c.l.b16 %v369
        %v567 = vunpack.c.h.b16 %v369
        %v568 = vunpack.c.l.b16 %v370
        %v569 = vunpack.c.l.b16 %v371
        %v570 = vunpack.c.h.b16 %v371
        %v571 = vunpack.c.l.b16 %v372
        %v572 = vunpack.c.h.b16 %v372
        %v573 = vunpack.c.l.b16 %v373
        %v574 = vunpack.c.l.b16 %v374
        %v575 = vunpack.c.h.b16 %v374
        %v576 = vunpack.c.l.b16 %v375
        %v577 = vunpack.c.h.b16 %v375
        %v578 = vunpack.c.l.b16 %v376
        %v579 = vunpack.c.l.b16 %v377
        %v580 = vunpack.c.h.b16 %v377
        %v581 = vunpack.c.l.b16 %v378
        %v582 = vunpack.c.h.b16 %v378
        %v583 = vunpack.c.l.b16 %v379
        %v584 = vunpack.c.l.b16 %v380
        %v585 = vunpack.c.h.b16 %v380
        %v586 = vunpack.c.l.b16 %v381
        %v587 = vunpack.c.h.b16 %v381
        %v588 = vunpack.c.l.b16 %v382
        %v589 = vunpack.c.l.b16 %v383
        %v590 = vunpack.c.h.b16 %v383
        %v591 = vunpack.c.l.b16 %v384
        %v592 = vunpack.c.h.b16 %v384
        %v593 = vunpack.c.l.b16 %v385
        %v594 = vpack.c.b16 %v519, %v514
        %v595 = vpack.c.b16 %v520, %v515
        %v596 = vpack.c.b16 %v521, %v516
        %v597 = vpack.c.b16 %v522, %v517
        %v598 = vpack.c.b16 %v523, %v518
        %v599 = vpack.c.b16 %v529, %v524
        %v600 = vpack.c.b16 %v530, %v525
        %v601 = vpack.c.b16 %v531, %v526
        %v602 = vpack.c.b16 %v532, %v527
        %v603 = vpack.c.b16 %v533, %v528
        %v604 = vpack.c.b16 %v539, %v534
        %v605 = vpack.c.b16 %v540, %v535
        %v606 = vpack.c.b16 %v541, %v536
        %v607 = vpack.c.b16 %v542, %v537
        %v608 = vpack.c.b16 %v543, %v538
        %v609 = vpack.c.b16 %v549, %v544
        %v610 = vpack.c.b16 %v550, %v545
        %v611 = vpack.c.b16 %v551, %v546
        %v612 = vpack.c.b16 %v552, %v547
        %v613 = vpack.c.b16 %v553, %v548
        %v614 = vpack.c.b16 %v559, %v554
        %v615 = vpack.c.b16 %v560, %v555
        %v616 = vpack.c.b16 %v561, %v556
        %v617 = vpack.c.b16 %v562, %v557
        %v618 = vpack.c.b16 %v563, %v558
        %v619 = vpack.c.b16 %v569, %v564
        %v620 = vpack.c.b16 %v570, %v565
        %v621 = vpack.c.b16 %v571, %v566
        %v622 = vpack.c.b16 %v572, %v567
        %v623 = vpack.c.b16 %v573, %v568
        %v624 = vpack.c.b16 %v579, %v574
        %v625 = vpack.c.b16 %v580, %v575
        %v626 = vpack.c.b16 %v581, %v576
        %v627 = vpack.c.b16 %v582, %v577
        %v628 = vpack.c.b16 %v583, %v578
        %v629 = vpack.c.b16 %v589, %v584
        %v630 = vpack.c.b16 %v590, %v585
        %v631 = vpack.c.b16 %v591, %v586
        %v632 = vpack.c.b16 %v592, %v587
        %v633 = vpack.c.b16 %v593, %v588
        %v754 = vunpack.c.l.b16 %v386
        %v755 = vunpack.c.l.b16 %v387
        %v756 = vunpack.c.l.b16 %v388
        %v757 = vunpack.c.l.b16 %v389
        %v758 = vunpack.c.l.b16 %v390
        %v759 = vunpack.c.l.b16 %v391
        %v760 = vunpack.c.l.b16 %v392
        %v761 = vunpack.c.l.b16 %v393
        %v762 = vunpack.c.l.b16 %v394
        %v763 = vunpack.c.l.b16 %v395
        %v764 = vunpack.c.l.b16 %v396
        %v765 = vunpack.c.l.b16 %v397
        %v766 = vunpack.c.l.b16 %v398
        %v767 = vunpack.c.l.b16 %v399
        %v768 = vunpack.c.l.b16 %v400
        %v769 = vunpack.c.l.b16 %v401
        %v770 = vunpack.c.l.b16 %v402
        %v771 = vunpack.c.l.b16 %v403
        %v772 = vunpack.c.l.b16 %v404
        %v773 = vunpack.c.l.b16 %v405
        %v774 = vunpack.c.l.b16 %v406
        %v775 = vunpack.c.l.b16 %v407
        %v776 = vunpack.c.l.b16 %v408
        %v777 = vunpack.c.l.b16 %v409
        %v778 = vunpack.c.l.b16 %v410
        %v779 = vunpack.c.l.b16 %v411
        %v780 = vunpack.c.l.b16 %v412
        %v781 = vunpack.c.l.b16 %v413
        %v782 = vunpack.c.l.b16 %v414
        %v783 = vunpack.c.l.b16 %v415
        %v784 = vunpack.c.l.b16 %v416
        %v785 = vunpack.c.l.b16 %v417
        %v786 = vunpack.c.l.b16 %v418
        %v787 = vunpack.c.l.b16 %v419
        %v788 = vunpack.c.l.b16 %v420
        %v789 = vunpack.c.l.b16 %v421
        %v790 = vunpack.c.l.b16 %v422
        %v791 = vunpack.c.l.b16 %v423
        %v792 = vunpack.c.l.b16 %v424
        %v793 = vunpack.c.l.b16 %v425
        %v794 = vunpack.c.l.b16 %v426
        %v795 = vunpack.c.l.b16 %v427
        %v796 = vunpack.c.l.b16 %v428
        %v797 = vunpack.c.l.b16 %v429
        %v798 = vunpack.c.l.b16 %v430
        %v799 = vunpack.c.l.b16 %v431
        %v800 = vunpack.c.l.b16 %v432
        %v801 = vunpack.c.l.b16 %v433
        %v802 = vunpack.c.l.b16 %v434
        %v803 = vunpack.c.l.b16 %v435
        %v804 = vunpack.c.l.b16 %v436
        %v805 = vunpack.c.l.b16 %v437
        %v806 = vunpack.c.l.b16 %v438
        %v807 = vunpack.c.l.b16 %v439
        %v808 = vunpack.c.l.b16 %v440
        %v809 = vunpack.c.l.b16 %v441
        %v810 = vunpack.c.l.b16 %v442
        %v811 = vunpack.c.l.b16 %v443
        %v812 = vunpack.c.l.b16 %v444
        %v813 = vunpack.c.l.b16 %v445
        %v814 = vunpack.c.l.b16 %v446
        %v815 = vunpack.c.l.b16 %v447
        %v816 = vunpack.c.l.b16 %v448
        %v817 = vunpack.c.l.b16 %v449
        %v818 = vunpack.c.l.b16 %v450
        %v819 = vunpack.c.l.b16 %v451
        %v820 = vunpack.c.l.b16 %v452
        %v821 = vunpack.c.l.b16 %v453
        %v822 = vunpack.c.l.b16 %v454
        %v823 = vunpack.c.l.b16 %v455
        %v824 = vunpack.c.l.b16 %v456
        %v825 = vunpack.c.l.b16 %v457
        %v826 = vunpack.c.l.b16 %v458
        %v827 = vunpack.c.l.b16 %v459
        %v828 = vunpack.c.l.b16 %v460
        %v829 = vunpack.c.l.b16 %v461
        %v830 = vunpack.c.l.b16 %v462
        %v831 = vunpack.c.l.b16 %v463
        %v832 = vunpack.c.l.b16 %v464
        %v833 = vunpack.c.l.b16 %v465
        %v834 = vpack.c.b16 %v755, %v754
        %v835 = vpack.c.b16 %v757, %v756
        %v836 = vpack.c.b16 %v759, %v758
        %v837 = vpack.c.b16 %v761, %v760
        %v838 = vpack.c.b16 %v763, %v762
        %v839 = vpack.c.b16 %v765, %v764
        %v840 = vpack.c.b16 %v767, %v766
        %v841 = vpack.c.b16 %v769, %v768
        %v842 = vpack.c.b16 %v771, %v770
        %v843 = vpack.c.b16 %v773, %v772
        %v844 = vpack.c.b16 %v775, %v774
        %v845 = vpack.c.b16 %v777, %v776
        %v846 = vpack.c.b16 %v779, %v778
        %v847 = vpack.c.b16 %v781, %v780
        %v848 = vpack.c.b16 %v783, %v782
        %v849 = vpack.c.b16 %v785, %v784
        %v850 = vpack.c.b16 %v787, %v786
        %v851 = vpack.c.b16 %v789, %v788
        %v852 = vpack.c.b16 %v791, %v790
        %v853 = vpack.c.b16 %v793, %v792
        %v854 = vpack.c.b16 %v795, %v794
        %v855 = vpack.c.b16 %v797, %v796
        %v856 = vpack.c.b16 %v799, %v798
        %v857 = vpack.c.b16 %v801, %v800
        %v858 = vpack.c.b16 %v803, %v802
        %v859 = vpack.c.b16 %v805, %v804
        %v860 = vpack.c.b16 %v807, %v806
        %v861 = vpack.c.b16 %v809, %v808
        %v862 = vpack.c.b16 %v811, %v810
        %v863 = vpack.c.b16 %v813, %v812
        %v864 = vpack.c.b16 %v815, %v814
        %v865 = vpack.c.b16 %v817, %v816
        %v866 = vpack.c.b16 %v819, %v818
        %v867 = vpack.c.b16 %v821, %v820
        %v868 = vpack.c.b16 %v823, %v822
        %v869 = vpack.c.b16 %v825, %v824
        %v870 = vpack.c.b16 %v827, %v826
        %v871 = vpack.c.b16 %v829, %v828
        %v872 = vpack.c.b16 %v831, %v830
        %v873 = vpack.c.b16 %v833, %v832
        %914 = vmatprep.subr.bf16.mxu0 0
        %915 = vmatpush1.bf16.msra.mxu0 %v834
        %916 = vmatprep.subr.bf16.mxu0 0
        %917 = vmatpush1.bf16.msra.mxu0 %v835
        %918 = vmatprep.subr.bf16.mxu0 0
        %919 = vmatpush1.bf16.msra.mxu0 %v836
        %920 = vmatprep.subr.bf16.mxu0 0
        %921 = vmatpush1.bf16.msra.mxu0 %v837
        %922 = vmatprep.subr.bf16.mxu0 0
        %923 = vmatpush1.bf16.msra.mxu0 %v838
        %924 = vmatprep.subr.bf16.mxu0 0
        %925 = vmatpush1.bf16.msra.mxu0 %v839
        %926 = vmatprep.subr.bf16.mxu0 0
        %927 = vmatpush1.bf16.msra.mxu0 %v840
        %928 = vmatprep.subr.bf16.mxu0 0
        %929 = vmatpush1.bf16.msra.mxu0 %v841
        %930 = vmatprep.subr.bf16.mxu0 0
        %931 = vmatpush1.bf16.msra.mxu0 %v842
        %932 = vmatprep.subr.bf16.mxu0 0
        %933 = vmatpush1.bf16.msra.mxu0 %v843
        %934 = vmatprep.subr.bf16.mxu0 0
        %935 = vmatpush1.bf16.msra.mxu0 %v844
        %936 = vmatprep.subr.bf16.mxu0 0
        %937 = vmatpush1.bf16.msra.mxu0 %v845
        %938 = vmatprep.subr.bf16.mxu0 0
        %939 = vmatpush1.bf16.msra.mxu0 %v846
        %940 = vmatprep.subr.bf16.mxu0 0
        %941 = vmatpush1.bf16.msra.mxu0 %v847
        %942 = vmatprep.subr.bf16.mxu0 0
        %943 = vmatpush1.bf16.msra.mxu0 %v848
        %944 = vmatprep.subr.bf16.mxu0 0
        %945 = vmatpush1.bf16.msra.mxu0 %v849
        %946 = vmatprep.mubr.bf16.mxu0 %v595
        %947 = vmatmul.mubr.bf16.gmra.mrb[0].mxu0 %v594
        %v948 = vpop.f32.mrb[0].mxu0
        %v949 = vadd.f32 0.0, %v948
        %v950 = vpop.f32.mrb[0].mxu0
        %v951 = vpop.f32.mrb[0].mxu0
        %v952 = vadd.f32 0.0, %v951
        %v953 = vpop.f32.mrb[0].mxu0
        %954 = vmatprep.mubr.bf16.mxu0 %v600
        %955 = vmatmul.mubr.bf16.gmra.mrb[0].mxu0 %v599
        %v956 = vpop.f32.mrb[0].mxu0
        %v957 = vadd.f32 0.0, %v956
        %v958 = vpop.f32.mrb[0].mxu0
        %v959 = vpop.f32.mrb[0].mxu0
        %v960 = vadd.f32 0.0, %v959
        %v961 = vpop.f32.mrb[0].mxu0
        %962 = vmatprep.mubr.bf16.mxu0 %v605
        %963 = vmatmul.mubr.bf16.gmra.mrb[0].mxu0 %v604
        %v964 = vpop.f32.mrb[0].mxu0
        %v965 = vadd.f32 0.0, %v964
        %v966 = vpop.f32.mrb[0].mxu0
        %v967 = vpop.f32.mrb[0].mxu0
        %v968 = vadd.f32 0.0, %v967
        %v969 = vpop.f32.mrb[0].mxu0
        %970 = vmatprep.mubr.bf16.mxu0 %v610
        %971 = vmatmul.mubr.bf16.gmra.mrb[0].mxu0 %v609
        %v972 = vpop.f32.mrb[0].mxu0
        %v973 = vadd.f32 0.0, %v972
        %v974 = vpop.f32.mrb[0].mxu0
        %v975 = vpop.f32.mrb[0].mxu0
        %v976 = vadd.f32 0.0, %v975
        %v977 = vpop.f32.mrb[0].mxu0
        %978 = vmatprep.mubr.bf16.mxu0 %v615
        %979 = vmatmul.mubr.bf16.gmra.mrb[0].mxu0 %v614
        %v980 = vpop.f32.mrb[0].mxu0
        %v981 = vadd.f32 0.0, %v980
        %v982 = vpop.f32.mrb[0].mxu0
        %v983 = vpop.f32.mrb[0].mxu0
        %v984 = vadd.f32 0.0, %v983
        %v985 = vpop.f32.mrb[0].mxu0
        %986 = vmatprep.mubr.bf16.mxu0 %v620
        %987 = vmatmul.mubr.bf16.gmra.mrb[0].mxu0 %v619
        %v988 = vpop.f32.mrb[0].mxu0
        %v989 = vadd.f32 0.0, %v988
        %v990 = vpop.f32.mrb[0].mxu0
        %v991 = vpop.f32.mrb[0].mxu0
        %v992 = vadd.f32 0.0, %v991
        %v993 = vpop.f32.mrb[0].mxu0
        %994 = vmatprep.mubr.bf16.mxu0 %v625
        %995 = vmatmul.mubr.bf16.gmra.mrb[0].mxu0 %v624
        %v996 = vpop.f32.mrb[0].mxu0
        %v997 = vadd.f32 0.0, %v996
        %v998 = vpop.f32.mrb[0].mxu0
        %v999 = vpop.f32.mrb[0].mxu0
        %v1000 = vadd.f32 0.0, %v999
        %v1001 = vpop.f32.mrb[0].mxu0
        %1002 = vmatprep.mubr.bf16.mxu0 %v630
        %1003 = vmatmul.mubr.bf16.gmra.mrb[0].mxu0 %v629
        %v1004 = vpop.f32.mrb[0].mxu0
        %v1005 = vadd.f32 0.0, %v1004
        %v1006 = vpop.f32.mrb[0].mxu0
        %v1007 = vpop.f32.mrb[0].mxu0
        %v1008 = vadd.f32 0.0, %v1007
        %v1009 = vpop.f32.mrb[0].mxu0
        %1010 = vdwg.mxu0
        %1011 = vmatprep.subr.bf16.mxu0 0
        %1012 = vmatpush1.bf16.msra.mxu0 %v850
        %1013 = vmatprep.subr.bf16.mxu0 0
        %1014 = vmatpush1.bf16.msra.mxu0 %v851
        %1015 = vmatprep.subr.bf16.mxu0 0
        %1016 = vmatpush1.bf16.msra.mxu0 %v852
        %1017 = vmatprep.subr.bf16.mxu0 0
        %1018 = vmatpush1.bf16.msra.mxu0 %v853
        %1019 = vmatprep.subr.bf16.mxu0 0
        %1020 = vmatpush1.bf16.msra.mxu0 %v854
        %1021 = vmatprep.subr.bf16.mxu0 0
        %1022 = vmatpush1.bf16.msra.mxu0 %v855
        %1023 = vmatprep.subr.bf16.mxu0 0
        %1024 = vmatpush1.bf16.msra.mxu0 %v856
        %1025 = vmatprep.subr.bf16.mxu0 0
        %1026 = vmatpush1.bf16.msra.mxu0 %v857
        %1027 = vmatprep.subr.bf16.mxu0 0
        %1028 = vmatpush1.bf16.msra.mxu0 %v858
        %1029 = vmatprep.subr.bf16.mxu0 0
        %1030 = vmatpush1.bf16.msra.mxu0 %v859
        %1031 = vmatprep.subr.bf16.mxu0 0
        %1032 = vmatpush1.bf16.msra.mxu0 %v860
        %1033 = vmatprep.subr.bf16.mxu0 0
        %1034 = vmatpush1.bf16.msra.mxu0 %v861
        %1035 = vmatprep.subr.bf16.mxu0 0
        %1036 = vmatpush1.bf16.msra.mxu0 %v862
        %1037 = vmatprep.subr.bf16.mxu0 0
        %1038 = vmatpush1.bf16.msra.mxu0 %v863
        %1039 = vmatprep.subr.bf16.mxu0 0
        %1040 = vmatpush1.bf16.msra.mxu0 %v864
        %1041 = vmatprep.subr.bf16.mxu0 0
        %1042 = vmatpush1.bf16.msra.mxu0 %v865
        %1043 = vmatprep.mubr.bf16.mxu0 %v597
        %1044 = vmatmul.mubr.bf16.gmra.mrb[0].mxu0 %v596
        %v1045 = vpop.f32.mrb[0].mxu0
        %v1046 = vadd.f32 %v949, %v1045
        %v1047 = vpop.f32.mrb[0].mxu0
        %v1048 = vpop.f32.mrb[0].mxu0
        %v1049 = vadd.f32 %v952, %v1048
        %v1050 = vpop.f32.mrb[0].mxu0
        %1051 = vmatprep.mubr.bf16.mxu0 %v602
        %1052 = vmatmul.mubr.bf16.gmra.mrb[0].mxu0 %v601
        %v1053 = vpop.f32.mrb[0].mxu0
        %v1054 = vadd.f32 %v957, %v1053
        %v1055 = vpop.f32.mrb[0].mxu0
        %v1056 = vpop.f32.mrb[0].mxu0
        %v1057 = vadd.f32 %v960, %v1056
        %v1058 = vpop.f32.mrb[0].mxu0
        %1059 = vmatprep.mubr.bf16.mxu0 %v607
        %1060 = vmatmul.mubr.bf16.gmra.mrb[0].mxu0 %v606
        %v1061 = vpop.f32.mrb[0].mxu0
        %v1062 = vadd.f32 %v965, %v1061
        %v1063 = vpop.f32.mrb[0].mxu0
        %v1064 = vpop.f32.mrb[0].mxu0
        %v1065 = vadd.f32 %v968, %v1064
        %v1066 = vpop.f32.mrb[0].mxu0
        %1067 = vmatprep.mubr.bf16.mxu0 %v612
        %1068 = vmatmul.mubr.bf16.gmra.mrb[0].mxu0 %v611
        %v1069 = vpop.f32.mrb[0].mxu0
        %v1070 = vadd.f32 %v973, %v1069
        %v1071 = vpop.f32.mrb[0].mxu0
        %v1072 = vpop.f32.mrb[0].mxu0
        %v1073 = vadd.f32 %v976, %v1072
        %v1074 = vpop.f32.mrb[0].mxu0
        %1075 = vmatprep.mubr.bf16.mxu0 %v617
        %1076 = vmatmul.mubr.bf16.gmra.mrb[0].mxu0 %v616
        %v1077 = vpop.f32.mrb[0].mxu0
        %v1078 = vadd.f32 %v981, %v1077
        %v1079 = vpop.f32.mrb[0].mxu0
        %v1080 = vpop.f32.mrb[0].mxu0
        %v1081 = vadd.f32 %v984, %v1080
        %v1082 = vpop.f32.mrb[0].mxu0
        %1083 = vmatprep.mubr.bf16.mxu0 %v622
        %1084 = vmatmul.mubr.bf16.gmra.mrb[0].mxu0 %v621
        %v1085 = vpop.f32.mrb[0].mxu0
        %v1086 = vadd.f32 %v989, %v1085
        %v1087 = vpop.f32.mrb[0].mxu0
        %v1088 = vpop.f32.mrb[0].mxu0
        %v1089 = vadd.f32 %v992, %v1088
        %v1090 = vpop.f32.mrb[0].mxu0
        %1091 = vmatprep.mubr.bf16.mxu0 %v627
        %1092 = vmatmul.mubr.bf16.gmra.mrb[0].mxu0 %v626
        %v1093 = vpop.f32.mrb[0].mxu0
        %v1094 = vadd.f32 %v997, %v1093
        %v1095 = vpop.f32.mrb[0].mxu0
        %v1096 = vpop.f32.mrb[0].mxu0
        %v1097 = vadd.f32 %v1000, %v1096
        %v1098 = vpop.f32.mrb[0].mxu0
        %1099 = vmatprep.mubr.bf16.mxu0 %v632
        %1100 = vmatmul.mubr.bf16.gmra.mrb[0].mxu0 %v631
        %v1101 = vpop.f32.mrb[0].mxu0
        %v1102 = vadd.f32 %v1005, %v1101
        %v1103 = vpop.f32.mrb[0].mxu0
        %v1104 = vpop.f32.mrb[0].mxu0
        %v1105 = vadd.f32 %v1008, %v1104
        %v1106 = vpop.f32.mrb[0].mxu0
        %1107 = vdwg.mxu0
        %1108 = vmatprep.subr.bf16.mxu0 0
        %1109 = vmatpush1.bf16.msra.mxu0 %v866
        %1110 = vmatprep.subr.bf16.mxu0 0
        %1111 = vmatpush1.bf16.msra.mxu0 %v867
        %1112 = vmatprep.subr.bf16.mxu0 0
        %1113 = vmatpush1.bf16.msra.mxu0 %v868
        %1114 = vmatprep.subr.bf16.mxu0 0
        %1115 = vmatpush1.bf16.msra.mxu0 %v869
        %1116 = vmatprep.subr.bf16.mxu0 0
        %1117 = vmatpush1.bf16.msra.mxu0 %v870
        %1118 = vmatprep.subr.bf16.mxu0 0
        %1119 = vmatpush1.bf16.msra.mxu0 %v871
        %1120 = vmatprep.subr.bf16.mxu0 0
        %1121 = vmatpush1.bf16.msra.mxu0 %v872
        %1122 = vmatprep.subr.bf16.mxu0 0
        %1123 = vmatpush1.bf16.msra.mxu0 %v873
        %1124 = vmatprep.subr.bf16.mxu0 0
        %1125 = vmatpush1.bf16.msra.mxu0 0
        %1126 = vmatprep.subr.bf16.mxu0 0
        %1127 = vmatpush1.bf16.msra.mxu0 0
        %1128 = vmatprep.subr.bf16.mxu0 0
        %1129 = vmatpush1.bf16.msra.mxu0 0
        %1130 = vmatprep.subr.bf16.mxu0 0
        %1131 = vmatpush1.bf16.msra.mxu0 0
        %1132 = vmatprep.subr.bf16.mxu0 0
        %1133 = vmatpush1.bf16.msra.mxu0 0
        %1134 = vmatprep.subr.bf16.mxu0 0
        %1135 = vmatpush1.bf16.msra.mxu0 0
        %1136 = vmatprep.subr.bf16.mxu0 0
        %1137 = vmatpush1.bf16.msra.mxu0 0
        %1138 = vmatprep.subr.bf16.mxu0 0
        %1139 = vmatpush1.bf16.msra.mxu0 0
        %1140 = vmatprep.mubr.bf16.mxu0 0
        %1141 = vmatmul.mubr.bf16.gmra.mrb[0].mxu0 %v598
        %v1142 = vpop.f32.mrb[0].mxu0
        %v1143 = vadd.f32 %v1046, %v1142
        %v1144 = vpop.f32.mrb[0].mxu0
        %v1145 = vpop.f32.mrb[0].mxu0
        %v1146 = vadd.f32 %v1049, %v1145
        %v1147 = vpop.f32.mrb[0].mxu0
        %1148 = vmatprep.mubr.bf16.mxu0 0
        %1149 = vmatmul.mubr.bf16.gmra.mrb[0].mxu0 %v603
        %v1150 = vpop.f32.mrb[0].mxu0
        %v1151 = vadd.f32 %v1054, %v1150
        %v1152 = vpop.f32.mrb[0].mxu0
        %v1153 = vpop.f32.mrb[0].mxu0
        %v1154 = vadd.f32 %v1057, %v1153
        %v1155 = vpop.f32.mrb[0].mxu0
        %1156 = vmatprep.mubr.bf16.mxu0 0
        %1157 = vmatmul.mubr.bf16.gmra.mrb[0].mxu0 %v608
        %v1158 = vpop.f32.mrb[0].mxu0
        %v1159 = vadd.f32 %v1062, %v1158
        %v1160 = vpop.f32.mrb[0].mxu0
        %v1161 = vpop.f32.mrb[0].mxu0
        %v1162 = vadd.f32 %v1065, %v1161
        %v1163 = vpop.f32.mrb[0].mxu0
        %1164 = vmatprep.mubr.bf16.mxu0 0
        %1165 = vmatmul.mubr.bf16.gmra.mrb[0].mxu0 %v613
        %v1166 = vpop.f32.mrb[0].mxu0
        %v1167 = vadd.f32 %v1070, %v1166
        %v1168 = vpop.f32.mrb[0].mxu0
        %v1169 = vpop.f32.mrb[0].mxu0
        %v1170 = vadd.f32 %v1073, %v1169
        %v1171 = vpop.f32.mrb[0].mxu0
        %1172 = vmatprep.mubr.bf16.mxu0 0
        %1173 = vmatmul.mubr.bf16.gmra.mrb[0].mxu0 %v618
        %v1174 = vpop.f32.mrb[0].mxu0
        %v1175 = vadd.f32 %v1078, %v1174
        %v1176 = vpop.f32.mrb[0].mxu0
        %v1177 = vpop.f32.mrb[0].mxu0
        %v1178 = vadd.f32 %v1081, %v1177
        %v1179 = vpop.f32.mrb[0].mxu0
        %1180 = vmatprep.mubr.bf16.mxu0 0
        %1181 = vmatmul.mubr.bf16.gmra.mrb[0].mxu0 %v623
        %v1182 = vpop.f32.mrb[0].mxu0
        %v1183 = vadd.f32 %v1086, %v1182
        %v1184 = vpop.f32.mrb[0].mxu0
        %v1185 = vpop.f32.mrb[0].mxu0
        %v1186 = vadd.f32 %v1089, %v1185
        %v1187 = vpop.f32.mrb[0].mxu0
        %1188 = vmatprep.mubr.bf16.mxu0 0
        %1189 = vmatmul.mubr.bf16.gmra.mrb[0].mxu0 %v628
        %v1190 = vpop.f32.mrb[0].mxu0
        %v1191 = vadd.f32 %v1094, %v1190
        %v1192 = vpop.f32.mrb[0].mxu0
        %v1193 = vpop.f32.mrb[0].mxu0
        %v1194 = vadd.f32 %v1097, %v1193
        %v1195 = vpop.f32.mrb[0].mxu0
        %1196 = vmatprep.mubr.bf16.mxu0 0
        %1197 = vmatmul.mubr.bf16.gmra.mrb[0].mxu0 %v633
        %v1198 = vpop.f32.mrb[0].mxu0
        %v1199 = vadd.f32 %v1102, %v1198
        %v1200 = vpop.f32.mrb[0].mxu0
        %v1201 = vpop.f32.mrb[0].mxu0
        %v1202 = vadd.f32 %v1105, %v1201
        %v1203 = vpop.f32.mrb[0].mxu0
        %1204 = vdwg.mxu0
        %v1205 = vadd.f32 %v322, %v1143
        %v1206 = vadd.f32 %v323, %v1146
        %v1207 = vadd.f32 %v324, %v1151
        %v1208 = vadd.f32 %v325, %v1154
        %v1209 = vadd.f32 %v326, %v1159
        %v1210 = vadd.f32 %v327, %v1162
        %v1211 = vadd.f32 %v328, %v1167
        %v1212 = vadd.f32 %v329, %v1170
        %v1213 = vadd.f32 %v330, %v1175
        %v1214 = vadd.f32 %v331, %v1178
        %v1215 = vadd.f32 %v332, %v1183
        %v1216 = vadd.f32 %v333, %v1186
        %v1217 = vadd.f32 %v334, %v1191
        %v1218 = vadd.f32 %v335, %v1194
        %v1219 = vadd.f32 %v336, %v1199
        %v1220 = vadd.f32 %v337, %v1202
        %1221 = vst [vmem:[#allocation2] sm:$0xff] %v1205
        %1222 = vst [vmem:[#allocation2 + $0x8] sm:$0xff] %v1206
        %1223 = vst [vmem:[#allocation2 + $0x10] sm:$0xff] %v1207
        %1224 = vst [vmem:[#allocation2 + $0x18] sm:$0xff] %v1208
        %1225 = vst [vmem:[#allocation2 + $0x20] sm:$0xff] %v1209
        %1226 = vst [vmem:[#allocation2 + $0x28] sm:$0xff] %v1210
        %1227 = vst [vmem:[#allocation2 + $0x30] sm:$0xff] %v1211
        %1228 = vst [vmem:[#allocation2 + $0x38] sm:$0xff] %v1212
        %1229 = vst [vmem:[#allocation2 + $0x40] sm:$0xff] %v1213
        %1230 = vst [vmem:[#allocation2 + $0x48] sm:$0xff] %v1214
        %1231 = vst [vmem:[#allocation2 + $0x50] sm:$0xff] %v1215
        %1232 = vst [vmem:[#allocation2 + $0x58] sm:$0xff] %v1216
        %1233 = vst [vmem:[#allocation2 + $0x60] sm:$0xff] %v1217
        %1234 = vst [vmem:[#allocation2 + $0x68] sm:$0xff] %v1218
        %1235 = vst [vmem:[#allocation2 + $0x70] sm:$0xff] %v1219
        %1236 = vst [vmem:[#allocation2 + $0x78] sm:$0xff] %v1220
        // Predicated region
        $region49: #{tpu_custom_call.1} parent=35 // pred_check
          %p1237 = pneg %p302
        $region50: #{tpu_custom_call.1} parent=35 // pred_check_branch
          %1239 = sbr.rel (%p1237) target = $region52
        $region51: #{tpu_custom_call.1} parent=35 // pred_region
          %v1240 = vld [vmem:[#allocation2] sm:$0xff]
          %v1241 = vld [vmem:[#allocation2 + $0x8] sm:$0xff]
          %v1242 = vld [vmem:[#allocation2 + $0x10] sm:$0xff]
          %v1243 = vld [vmem:[#allocation2 + $0x18] sm:$0xff]
          %v1244 = vld [vmem:[#allocation2 + $0x20] sm:$0xff]
          %v1245 = vld [vmem:[#allocation2 + $0x28] sm:$0xff]
          %v1246 = vld [vmem:[#allocation2 + $0x30] sm:$0xff]
          %v1247 = vld [vmem:[#allocation2 + $0x38] sm:$0xff]
          %v1248 = vld [vmem:[#allocation2 + $0x40] sm:$0xff]
          %v1249 = vld [vmem:[#allocation2 + $0x48] sm:$0xff]
          %v1250 = vld [vmem:[#allocation2 + $0x50] sm:$0xff]
          %v1251 = vld [vmem:[#allocation2 + $0x58] sm:$0xff]
          %v1252 = vld [vmem:[#allocation2 + $0x60] sm:$0xff]
          %v1253 = vld [vmem:[#allocation2 + $0x68] sm:$0xff]
          %v1254 = vld [vmem:[#allocation2 + $0x70] sm:$0xff]
          %v1255 = vld [vmem:[#allocation2 + $0x78] sm:$0xff]
          %v1256 = vld [vmem:[%s296] sm:$0x1]
          %v1258 = vlaneseq
          %v1259 = vshrl.u32 %v1258, 7
          %v1260 = vsub.s32 0, %v1259
          %v1261 = vrot.slane %v1256, %v1260
          %v1263 = vmul.f32 %v1240, %v1261
          %v1264 = vmul.f32 %v1241, %v1261
          %v1265 = vmul.f32 %v1242, %v1261
          %v1266 = vmul.f32 %v1243, %v1261
          %v1267 = vmul.f32 %v1244, %v1261
          %v1268 = vmul.f32 %v1245, %v1261
          %v1269 = vmul.f32 %v1246, %v1261
          %v1270 = vmul.f32 %v1247, %v1261
          %v1271 = vmul.f32 %v1248, %v1261
          %v1272 = vmul.f32 %v1249, %v1261
          %v1273 = vmul.f32 %v1250, %v1261
          %v1274 = vmul.f32 %v1251, %v1261
          %v1275 = vmul.f32 %v1252, %v1261
          %v1276 = vmul.f32 %v1253, %v1261
          %v1277 = vmul.f32 %v1254, %v1261
          %v1278 = vmul.f32 %v1255, %v1261
          %v1279 = vld [vmem:[%s299] sm:$0x1]
          %v1281 = vlaneseq
          %v1282 = vshrl.u32 %v1281, 7
          %v1283 = vsub.s32 0, %v1282
          %v1284 = vrot.slane %v1279, %v1283
          %v1286 = vadd.f32 %v1263, %v1284
          %v1287 = vadd.f32 %v1264, %v1284
          %v1288 = vadd.f32 %v1265, %v1284
          %v1289 = vadd.f32 %v1266, %v1284
          %v1290 = vadd.f32 %v1267, %v1284
          %v1291 = vadd.f32 %v1268, %v1284
          %v1292 = vadd.f32 %v1269, %v1284
          %v1293 = vadd.f32 %v1270, %v1284
          %v1294 = vadd.f32 %v1271, %v1284
          %v1295 = vadd.f32 %v1272, %v1284
          %v1296 = vadd.f32 %v1273, %v1284
          %v1297 = vadd.f32 %v1274, %v1284
          %v1298 = vadd.f32 %v1275, %v1284
          %v1299 = vadd.f32 %v1276, %v1284
          %v1300 = vadd.f32 %v1277, %v1284
          %v1301 = vadd.f32 %v1278, %v1284
          %v1302 = vmax.f32 %v1286, 0.0
          %v1303 = vmax.f32 %v1287, 0.0
          %v1304 = vmax.f32 %v1288, 0.0
          %v1305 = vmax.f32 %v1289, 0.0
          %v1306 = vmax.f32 %v1290, 0.0
          %v1307 = vmax.f32 %v1291, 0.0
          %v1308 = vmax.f32 %v1292, 0.0
          %v1309 = vmax.f32 %v1293, 0.0
          %v1310 = vmax.f32 %v1294, 0.0
          %v1311 = vmax.f32 %v1295, 0.0
          %v1312 = vmax.f32 %v1296, 0.0
          %v1313 = vmax.f32 %v1297, 0.0
          %v1314 = vmax.f32 %v1298, 0.0
          %v1315 = vmax.f32 %v1299, 0.0
          %v1316 = vmax.f32 %v1300, 0.0
          %v1317 = vmax.f32 %v1301, 0.0
          %1318 = vst [vmem:[%s290] sm:$0xff] %v1302
          %1319 = vst [vmem:[%s290 + $0x8] sm:$0xff] %v1303
          %1320 = vst [vmem:[%s290 + $0x10] sm:$0xff] %v1304
          %1321 = vst [vmem:[%s290 + $0x18] sm:$0xff] %v1305
          %1322 = vst [vmem:[%s290 + $0x20] sm:$0xff] %v1306
          %1323 = vst [vmem:[%s290 + $0x28] sm:$0xff] %v1307
          %1324 = vst [vmem:[%s290 + $0x30] sm:$0xff] %v1308
          %1325 = vst [vmem:[%s290 + $0x38] sm:$0xff] %v1309
          %1326 = vst [vmem:[%s290 + $0x40] sm:$0xff] %v1310
          %1327 = vst [vmem:[%s290 + $0x48] sm:$0xff] %v1311
          %1328 = vst [vmem:[%s290 + $0x50] sm:$0xff] %v1312
          %1329 = vst [vmem:[%s290 + $0x58] sm:$0xff] %v1313
          %1330 = vst [vmem:[%s290 + $0x60] sm:$0xff] %v1314
          %1331 = vst [vmem:[%s290 + $0x68] sm:$0xff] %v1315
          %1332 = vst [vmem:[%s290 + $0x70] sm:$0xff] %v1316
          %1333 = vst [vmem:[%s290 + $0x78] sm:$0xff] %v1317
        $region52: #{tpu_custom_call.1} parent=35 // pred_fallthru
          _
        %s1334 = sand.u32 %s159, 1
        %s1335 = scalar_lea.sflag [#allocation5], %s1334
        %s1336 = sand.u32 %s159, 1
        %s1337 = smul.addr %s1336, 128
        %s1338 = scalar_lea.vmem [#allocation8], %s1337
        // Predicated region
        $region53: #{tpu_custom_call.1} parent=35 // pred_check
          %p1339 = pneg %p169
        $region54: #{tpu_custom_call.1} parent=35 // pred_check_branch
          %1341 = sbr.rel (%p1339) target = $region56
        $region55: #{tpu_custom_call.1} parent=35 // pred_region
          %s1342 = smul.u32 16, %s27
          %s1344 = ssub.s32 2048, 2048
          %1345 = vsyncadd %s1335, %s1344
          %s1346 = smul.addr %s1342, 2
          %s1347 = sadd.s32 %s28, %s1346
          %s1348 = smul.addr %s1347, 128
          %s1349 = scalar_lea.hbm %s4, %s1348
          %s1350 = sshll.u32 %s1338, 4
          %s1351 = int_to_ptr.vmem [resolvable:$true] %s1350
          %1356 = dma.vmem_to_hbm [thread:$0]  %s1351, 2048, %s1349, %s1335, 128, 256, 8
        $region56: #{tpu_custom_call.1} parent=35 // pred_fallthru
          _
      $region36: #{tpu_custom_call.1} parent=5 // pred_fallthru
        _
      %p1357 = scmp.le.s32.totalorder 2, %s17
      // Predicated region
      $region57: #{tpu_custom_call.1} parent=5 // pred_check
        %p1358 = pneg %p1357
      $region58: #{tpu_custom_call.1} parent=5 // pred_check_branch
        %1360 = sbr.rel (%p1358) target = $region60
      $region59: #{tpu_custom_call.1} parent=5 // pred_region
        %s1361 = ssub.s32 %s17, 2
        // Predicated region
        $region61: #{tpu_custom_call.1} parent=59 // pred_check
          %p1362 = pneg %p175
        $region62: #{tpu_custom_call.1} parent=59 // pred_check_branch
          %1364 = sbr.rel (%p1362) target = $region64
        $region63: #{tpu_custom_call.1} parent=59 // pred_region
          %s1365 = sand.u32 %s160, 1
          %s1366 = scalar_lea.sflag [#allocation5], %s1365
          %s1367 = sand.u32 %s160, 1
          %s1368 = smul.addr %s1367, 128
          %s1369 = scalar_lea.vmem [#allocation8], %s1368
          %1370 = dma.done %s1366, 2048
        $region64: #{tpu_custom_call.1} parent=59 // pred_fallthru
          _
      $region60: #{tpu_custom_call.1} parent=5 // pred_fallthru
        _
    $region6: #{tpu_custom_call.1} parent=1 // loop_footer
      %s21 = sadd.s32 1, %s17
    $region7: #{tpu_custom_call.1} parent=1 // loop_footer_branch
      %16 = sbr.rel target = $region3
    $region8: #{tpu_custom_call.1} parent=1 // loop_exit
      _
    %1371 = vsyncpa [#allocation4], 1
    %s1372 = scalar_lea.sflag [#allocation4], 1
    %1373 = vsyncpa %s1372, 1
    %1374 = vsyncpa [#allocation7], 1
    %s1375 = scalar_lea.sflag [#allocation7], 1
    %1376 = vsyncpa %s1375, 1
    %1377 = vsyncpa [#allocation5], 1
    %s1378 = scalar_lea.sflag [#allocation5], 1
    %1379 = vsyncpa %s1378, 1

</llo_original>
